<compile_context>
chip_gen: v5e
topology: v5e:2x2
jax: 0.10.0
libtpu: 0.0.40
codegen_flags: <defaults>
</compile_context>

<pallas_src>
import numpy as np
import jax
import jax.numpy as jnp
from jax.experimental import pallas as pl
from jax.experimental.pallas import tpu as pltpu


# -----------------------------------------------------------------------------
# db3 reconstruction filters (== pywt.Wavelet('db3').rec_lo / rec_hi).
# -----------------------------------------------------------------------------
_DB3_REC_LO = np.array(
    [0.3326705529509569, 0.8068915093133388, 0.4598775021193313,
     -0.13501102001039084, -0.08544127388224149, 0.035226291882100656],
    dtype=np.float64)
_DB3_REC_HI = np.array(
    [0.035226291882100656, 0.08544127388224149, -0.13501102001039084,
     -0.4598775021193313, 0.8068915093133388, -0.3326705529509569],
    dtype=np.float64)


def _round_up(x: int, m: int) -> int:
    return ((x + m - 1) // m) * m


def _synthesis_matrix(n_in: int, filt: np.ndarray) -> np.ndarray:
    """Matrix W (n_in, n_out) such that y = x @ W reproduces
    torch.conv_transpose2d(x, filt, stride=2, padding=L-2) along one axis
    (the sfb1d used by pytorch_wavelets for non-periodization modes)."""
    L = len(filt)
    p = L - 2
    n_out = 2 * n_in + 2 - L
    W = np.zeros((n_in, n_out), dtype=np.float32)
    for i in range(n_in):
        for o in range(n_out):
            t = o + p - 2 * i
            if 0 <= t < L:
                W[i, o] = filt[t]
    return W


# -----------------------------------------------------------------------------
# Grid / tile selection helpers.
# -----------------------------------------------------------------------------
def _tensorcores_per_chip() -> int:
    """Best-effort: 2 TensorCores per chip on v7x, 1 on v5e/v6e."""
    try:
        kind = jax.devices()[0].device_kind.lower()
    except Exception:
        return 1
    return 2 if ("v7" in kind or "tpu7" in kind) else 1


def _choose_grid(bc, per_slab_bytes, fixed_bytes, *, max_tb=32,
                 budget_bytes=24 * 1024 * 1024):
    """Pick the number of slab-blocks g (tb = bc // g) so one grid step fits the
    VMEM budget; prefer 1 step on single-TC chips (lowest fixed overhead) and an
    even grid with >=2 steps per core on dual-TC chips."""
    ncores = _tensorcores_per_chip()
    avail = max(budget_bytes - fixed_bytes, per_slab_bytes)
    max_tb_mem = max(1, min(max_tb, avail // per_slab_bytes))
    divisors = [d for d in range(1, bc + 1) if bc % d == 0]
    feasible = [g for g in divisors if bc // g <= max_tb_mem] or [bc]
    if ncores <= 1:
        return feasible[0]                      # fewest steps that fit VMEM
    good = [g for g in feasible if g % ncores == 0 and g >= 2 * ncores]
    if good:
        return good[0]                          # >=2 steps per core, even
    good = [g for g in feasible if g % ncores == 0]
    if good:
        return good[0]                          # at least balanced across cores
    return feasible[0]


# -----------------------------------------------------------------------------
# Pallas kernel: single-level 2D synthesis filter bank for a block of tb slabs.
#
#   ll/lh/hl/hh : (tb*hp, w)  per-slab subbands, rows [h:hp) zero-padded
#   g0r, g1r    : (w, wp)     row-synthesis matrices, lanes [wo:wp) zero
#   gc          : (hop, 2*hp) [g0c^T | pad | g1c^T | pad], rows [ho:hop) zero
#   out         : (tb, hop, wp)
#   y2 scratch  : (2*hp, tb*wp)  lane-folded stage-1 results
#
# Stage 1 (row synthesis, all slabs fused into M):
#   ya = LL @ g0r + HL @ g1r ;  yb = LH @ g0r + HH @ g1r        (tb*hp, wp)
# Stage 2 (column synthesis, slabs folded into N -> ONE matmul):
#   out_all = gc @ [ya_i ; yb_i]_lanefolded                      (hop, tb*wp)
# -----------------------------------------------------------------------------
def _sfb2d_kernel(ll_ref, lh_ref, hl_ref, hh_ref, g0r_ref, g1r_ref, gc_ref,
                  out_ref, y2_ref):
    tb, hop, wp = out_ref.shape
    hp = gc_ref.shape[1] // 2

    g0r = g0r_ref[...]
    g1r = g1r_ref[...]

    ya = (jnp.dot(ll_ref[...], g0r, preferred_element_type=jnp.float32)
          + jnp.dot(hl_ref[...], g1r, preferred_element_type=jnp.float32))
    yb = (jnp.dot(lh_ref[...], g0r, preferred_element_type=jnp.float32)
          + jnp.dot(hh_ref[...], g1r, preferred_element_type=jnp.float32))

    # Lane-fold the slabs.  All slices are (8,128)-aligned (hp%8==0, wp%128==0).
    for i in range(tb):                                        # static unroll
        y2_ref[0:hp, i * wp:(i + 1) * wp] = ya[i * hp:(i + 1) * hp, :]
        y2_ref[hp:2 * hp, i * wp:(i + 1) * wp] = yb[i * hp:(i + 1) * hp, :]

    # Single fused column-synthesis matmul (N = tb*wp).
    out_all = jnp.dot(gc_ref[...], y2_ref[...],
                      preferred_element_type=jnp.float32)      # (hop, tb*wp)

    # Scatter slabs back with lane-aligned, full-vreg stores.
    for i in range(tb):                                        # static unroll
        out_ref[i] = out_all[:, i * wp:(i + 1) * wp]


def sfb2d_pallas(ll, lh, hl, hh, g0r_p, g1r_p, gc_p, *, hp, hop, wp):
    """ll/lh/hl/hh: (bc*hp, w) f32;  g0r_p/g1r_p: (w, wp);  gc_p: (hop, 2*hp)."""
    bchp, w = ll.shape
    bc = bchp // hp

    # Rough per-grid-step VMEM estimate (bytes): double-buffered inputs/output,
    # the lane-folded scratch, and the live stage-1 / stage-2 values.
    per_slab = 32 * hp * w + 12 * hop * wp + 16 * hp * wp
    fixed = 16 * w * wp + 16 * hop * hp          # double-buffered matrices
    g = _choose_grid(bc, per_slab, fixed)
    tb = bc // g

    x_spec = pl.BlockSpec((tb * hp, w), lambda i: (i, 0))
    r_spec = pl.BlockSpec((w, wp), lambda i: (0, 0))
    c_spec = pl.BlockSpec((hop, 2 * hp), lambda i: (0, 0))

    return pl.pallas_call(
        _sfb2d_kernel,
        out_shape=jax.ShapeDtypeStruct((bc, hop, wp), jnp.float32),
        grid=(g,),
        in_specs=[x_spec, x_spec, x_spec, x_spec, r_spec, r_spec, c_spec],
        out_specs=pl.BlockSpec((tb, hop, wp), lambda i: (i, 0, 0)),
        scratch_shapes=[pltpu.VMEM((2 * hp, tb * wp), jnp.float32)],
        compiler_params=pltpu.CompilerParams(
            dimension_semantics=("parallel",),
            vmem_limit_bytes=64 * 1024 * 1024),
    )(ll, lh, hl, hh, g0r_p, g1r_p, gc_p)


# -----------------------------------------------------------------------------
# Module port.
# -----------------------------------------------------------------------------
class InverseWaveletSubbandsTransform:
    def __init__(self, imgs_size, in_ch=1, scale=3, mode='reflect', wave='db3',
                 ordered=False):
        assert in_ch == 1
        assert wave == 'db3'
        # For synthesis, pytorch_wavelets treats these modes identically
        # (conv_transpose with padding = L-2); 'per'/'periodization' would differ.
        assert mode in ('zero', 'symmetric', 'reflect', 'periodic')
        self._j = scale
        self._imgs_size = imgs_size
        self._ordered = ordered
        self._mat_cache = {}   # (h, w) -> numpy synthesis matrices + sizes
        self._forward = jax.jit(self._forward_impl, static_argnames=('use_pallas',))

    # -- per-level synthesis matrices, built once per (h, w), cached ----------
    def _mats(self, h, w):
        key = (h, w)
        m = self._mat_cache.get(key)
        if m is None:
            g0c = _synthesis_matrix(h, _DB3_REC_LO)   # (h, ho)
            g1c = _synthesis_matrix(h, _DB3_REC_HI)
            g0r = _synthesis_matrix(w, _DB3_REC_LO)   # (w, wo)
            g1r = _synthesis_matrix(w, _DB3_REC_HI)
            ho, wo = g0c.shape[1], g0r.shape[1]
            hp = _round_up(h, 8)       # sublane-aligned slab row groups
            hop = _round_up(ho, 8)     # sublane-aligned output rows
            wp = _round_up(wo, 128)    # lane-dense output width
            g0r_p = np.zeros((w, wp), dtype=np.float32)
            g0r_p[:, :wo] = g0r
            g1r_p = np.zeros((w, wp), dtype=np.float32)
            g1r_p[:, :wo] = g1r
            gc_p = np.zeros((hop, 2 * hp), dtype=np.float32)
            gc_p[:ho, :h] = g0c.T
            gc_p[:ho, hp:hp + h] = g1c.T
            m = dict(g0c=g0c, g1c=g1c, g0r=g0r, g1r=g1r,
                     g0r_p=g0r_p, g1r_p=g1r_p, gc_p=gc_p,
                     ho=ho, wo=wo, hp=hp, hop=hop, wp=wp)
            self._mat_cache[key] = m
        return m

    def _split_subbands(self, recon):
        b, c, h, w = recon.shape
        n_s = c // 4
        y_l = recon[:, :n_s]
        if self._ordered:
            y_h = recon[:, n_s:].reshape(b, 3, n_s, h, w).transpose(0, 2, 1, 3, 4)
        else:
            y_h = recon[:, n_s:].reshape(b, n_s, 3, h, w)
        bc = b * n_s
        f32 = jnp.float32
        ll = y_l.reshape(bc, h, w).astype(f32)
        lh = y_h[:, :, 0].reshape(bc, h, w).astype(f32)
        hl = y_h[:, :, 1].reshape(bc, h, w).astype(f32)
        hh = y_h[:, :, 2].reshape(bc, h, w).astype(f32)
        return b, n_s, h, w, ll, lh, hl, hh

    def _one_level(self, recon, use_pallas=True):
        b, n_s, h, w, ll, lh, hl, hh = self._split_subbands(recon)
        m = self._mats(h, w)
        ho, wo = m['ho'], m['wo']

        if use_pallas:
            hp, hop, wp = m['hp'], m['hop'], m['wp']

            def prep(sub):
                # Row-pad to a multiple of 8 (XLA fuses this with the subband
                # slice above) and flatten slab/row dims (free, contiguous).
                if hp > h:
                    sub = jnp.pad(sub, ((0, 0), (0, hp - h), (0, 0)))
                return sub.reshape(b * n_s * hp, w)

            out = sfb2d_pallas(prep(ll), prep(lh), prep(hl), prep(hh),
                               jnp.asarray(m['g0r_p']),
                               jnp.asarray(m['g1r_p']),
                               jnp.asarray(m['gc_p']),
                               hp=hp, hop=hop, wp=wp)
            out = out[:, :ho, :wo]          # crop row/lane padding (exact zeros)
        else:
            # Pure-JAX reference (unfused 6-matmul formulation) for verification.
            g0c, g1c = jnp.asarray(m['g0c']), jnp.asarray(m['g1c'])
            g0r, g1r = jnp.asarray(m['g0r']), jnp.asarray(m['g1r'])
            hpz = jax.lax.Precision.HIGHEST
            lo = (jnp.einsum('bhw,ho->bow', ll, g0c, precision=hpz)
                  + jnp.einsum('bhw,ho->bow', lh, g1c, precision=hpz))
            hi = (jnp.einsum('bhw,ho->bow', hl, g0c, precision=hpz)
                  + jnp.einsum('bhw,ho->bow', hh, g1c, precision=hpz))
            out = (jnp.einsum('bhw,wo->bho', lo, g0r, precision=hpz)
                   + jnp.einsum('bhw,wo->bho', hi, g1r, precision=hpz))

        return out.reshape(b, n_s, ho, wo)

    def _forward_impl(self, x, use_pallas=True):
        recon = x
        for _ in range(self._j):
            recon = self._one_level(recon, use_pallas=use_pallas)
        s = self._imgs_size
        return recon[:, :, :s, :s]

    def __call__(self, x, use_pallas=True):
        return self._forward(x, use_pallas=use_pallas)


if __name__ == "__main__":
    key = jax.random.PRNGKey(0)
    scale = 2
    imgs_size = 16
    b, c, h, w = 2, 4 ** scale, 8, 8          # channels must be 4**scale for in_ch=1
    x = jax.random.normal(key, (b, c, h, w), dtype=jnp.float32)

    model = InverseWaveletSubbandsTransform(imgs_size=imgs_size, in_ch=1,
                                            scale=scale, mode='reflect',
                                            wave='db3', ordered=False)

    y = jax.block_until_ready(model(x, use_pallas=True))
    y_ref = jax.block_until_ready(model(x, use_pallas=False))

    assert y.shape == (b, 1, imgs_size, imgs_size), y.shape
    np.testing.assert_allclose(np.asarray(y), np.asarray(y_ref),
                               rtol=1e-3, atol=1e-3)
    print("KERNEL_OK")
</pallas_src>

<mosaic_0001>
module attributes {stable_mosaic.version = 11 : i64} {
  func.func @_sfb2d_kernel(%arg0: i32, %arg1: memref<32x12xf32, #tpu.memory_space<vmem>>, %arg2: memref<32x12xf32, #tpu.memory_space<vmem>>, %arg3: memref<32x12xf32, #tpu.memory_space<vmem>>, %arg4: memref<32x12xf32, #tpu.memory_space<vmem>>, %arg5: memref<12x128xf32, #tpu.memory_space<vmem>>, %arg6: memref<12x128xf32, #tpu.memory_space<vmem>>, %arg7: memref<24x32xf32, #tpu.memory_space<vmem>>, %arg8: memref<2x24x128xf32, #tpu.memory_space<vmem>>, %arg9: memref<32x256xf32, #tpu.memory_space<vmem>>) attributes {dimension_semantics = [#tpu.dimension_semantics<parallel>], iteration_bounds = array<i64: 1>, scalar_prefetch = 0 : i64, scratch_operands = 1 : i64, tpu.core_type = #tpu.core_type<tc>, window_params = [{transform_indices = @transform_0, window_bounds = array<i64: 32, 12>}, {transform_indices = @transform_1, window_bounds = array<i64: 32, 12>}, {transform_indices = @transform_2, window_bounds = array<i64: 32, 12>}, {transform_indices = @transform_3, window_bounds = array<i64: 32, 12>}, {pipeline_mode = #tpu.pipeline_mode<synchronous>, transform_indices = @transform_4, window_bounds = array<i64: 12, 128>}, {pipeline_mode = #tpu.pipeline_mode<synchronous>, transform_indices = @transform_5, window_bounds = array<i64: 12, 128>}, {pipeline_mode = #tpu.pipeline_mode<synchronous>, transform_indices = @transform_6, window_bounds = array<i64: 24, 32>}, {transform_indices = @transform_7, window_bounds = array<i64: 2, 24, 128>}]} {
    %c0 = arith.constant 0 : index
    %c0_0 = arith.constant 0 : index
    %0 = vector.load %arg5[%c0, %c0_0] : memref<12x128xf32, #tpu.memory_space<vmem>>, vector<12x128xf32>
    %c0_1 = arith.constant 0 : index
    %c0_2 = arith.constant 0 : index
    %1 = vector.load %arg6[%c0_1, %c0_2] : memref<12x128xf32, #tpu.memory_space<vmem>>, vector<12x128xf32>
    %c0_3 = arith.constant 0 : index
    %c0_4 = arith.constant 0 : index
    %2 = vector.load %arg1[%c0_3, %c0_4] : memref<32x12xf32, #tpu.memory_space<vmem>>, vector<32x12xf32>
    %cst = arith.constant dense<0.000000e+00> : vector<32x128xf32>
    %3 = tpu.matmul %2, %0, %cst {dimension_numbers = #tpu.dot_dimension_numbers<[1], [0], [0], [1], [0, 0, 1, 1], [], []>} : vector<32x12xf32>, vector<12x128xf32>, vector<32x128xf32> -> vector<32x128xf32>
    %c0_5 = arith.constant 0 : index
    %c0_6 = arith.constant 0 : index
    %4 = vector.load %arg3[%c0_5, %c0_6] : memref<32x12xf32, #tpu.memory_space<vmem>>, vector<32x12xf32>
    %cst_7 = arith.constant dense<0.000000e+00> : vector<32x128xf32>
    %5 = tpu.matmul %4, %1, %cst_7 {dimension_numbers = #tpu.dot_dimension_numbers<[1], [0], [0], [1], [0, 0, 1, 1], [], []>} : vector<32x12xf32>, vector<12x128xf32>, vector<32x128xf32> -> vector<32x128xf32>
    %6 = arith.addf %3, %5 : vector<32x128xf32>
    %c0_8 = arith.constant 0 : index
    %c0_9 = arith.constant 0 : index
    %7 = vector.load %arg2[%c0_8, %c0_9] : memref<32x12xf32, #tpu.memory_space<vmem>>, vector<32x12xf32>
    %cst_10 = arith.constant dense<0.000000e+00> : vector<32x128xf32>
    %8 = tpu.matmul %7, %0, %cst_10 {dimension_numbers = #tpu.dot_dimension_numbers<[1], [0], [0], [1], [0, 0, 1, 1], [], []>} : vector<32x12xf32>, vector<12x128xf32>, vector<32x128xf32> -> vector<32x128xf32>
    %c0_11 = arith.constant 0 : index
    %c0_12 = arith.constant 0 : index
    %9 = vector.load %arg4[%c0_11, %c0_12] : memref<32x12xf32, #tpu.memory_space<vmem>>, vector<32x12xf32>
    %cst_13 = arith.constant dense<0.000000e+00> : vector<32x128xf32>
    %10 = tpu.matmul %9, %1, %cst_13 {dimension_numbers = #tpu.dot_dimension_numbers<[1], [0], [0], [1], [0, 0, 1, 1], [], []>} : vector<32x12xf32>, vector<12x128xf32>, vector<32x128xf32> -> vector<32x128xf32>
    %11 = arith.addf %8, %10 : vector<32x128xf32>
    %12 = vector.extract_strided_slice %6 {offsets = [0, 0], sizes = [16, 128], strides = [1, 1]} : vector<32x128xf32> to vector<16x128xf32>
    %c0_14 = arith.constant 0 : index
    %c0_15 = arith.constant 0 : index
    %13 = vector.load %arg9[%c0_14, %c0_15] : memref<32x256xf32, #tpu.memory_space<vmem>>, vector<16x128xf32>
    tpu.vector_store %arg9[%c0_14, %c0_15], %12 {strides = array<i32>} : memref<32x256xf32, #tpu.memory_space<vmem>>, vector<16x128xf32>,
    %14 = vector.extract_strided_slice %11 {offsets = [0, 0], sizes = [16, 128], strides = [1, 1]} : vector<32x128xf32> to vector<16x128xf32>
    %c16 = arith.constant 16 : index
    %c0_16 = arith.constant 0 : index
    %15 = vector.load %arg9[%c16, %c0_16] : memref<32x256xf32, #tpu.memory_space<vmem>>, vector<16x128xf32>
    tpu.vector_store %arg9[%c16, %c0_16], %14 {strides = array<i32>} : memref<32x256xf32, #tpu.memory_space<vmem>>, vector<16x128xf32>,
    %16 = vector.extract_strided_slice %6 {offsets = [16, 0], sizes = [16, 128], strides = [1, 1]} : vector<32x128xf32> to vector<16x128xf32>
    %c0_17 = arith.constant 0 : index
    %c128 = arith.constant 128 : index
    %17 = vector.load %arg9[%c0_17, %c128] : memref<32x256xf32, #tpu.memory_space<vmem>>, vector<16x128xf32>
    tpu.vector_store %arg9[%c0_17, %c128], %16 {strides = array<i32>} : memref<32x256xf32, #tpu.memory_space<vmem>>, vector<16x128xf32>,
    %18 = vector.extract_strided_slice %11 {offsets = [16, 0], sizes = [16, 128], strides = [1, 1]} : vector<32x128xf32> to vector<16x128xf32>
    %c16_18 = arith.constant 16 : index
    %c128_19 = arith.constant 128 : index
    %19 = vector.load %arg9[%c16_18, %c128_19] : memref<32x256xf32, #tpu.memory_space<vmem>>, vector<16x128xf32>
    tpu.vector_store %arg9[%c16_18, %c128_19], %18 {strides = array<i32>} : memref<32x256xf32, #tpu.memory_space<vmem>>, vector<16x128xf32>,
    %c0_20 = arith.constant 0 : index
    %c0_21 = arith.constant 0 : index
    %20 = vector.load %arg7[%c0_20, %c0_21] : memref<24x32xf32, #tpu.memory_space<vmem>>, vector<24x32xf32>
    %c0_22 = arith.constant 0 : index
    %c0_23 = arith.constant 0 : index
    %21 = vector.load %arg9[%c0_22, %c0_23] : memref<32x256xf32, #tpu.memory_space<vmem>>, vector<32x256xf32>
    %cst_24 = arith.constant dense<0.000000e+00> : vector<24x256xf32>
    %22 = tpu.matmul %20, %21, %cst_24 {dimension_numbers = #tpu.dot_dimension_numbers<[1], [0], [0], [1], [0, 0, 1, 1], [], []>} : vector<24x32xf32>, vector<32x256xf32>, vector<24x256xf32> -> vector<24x256xf32>
    %23 = vector.extract_strided_slice %22 {offsets = [0, 0], sizes = [24, 128], strides = [1, 1]} : vector<24x256xf32> to vector<24x128xf32>
    %c0_25 = arith.constant 0 : index
    %c0_26 = arith.constant 0 : index
    %c0_27 = arith.constant 0 : index
    %24 = vector.load %arg8[%c0_25, %c0_26, %c0_27] : memref<2x24x128xf32, #tpu.memory_space<vmem>>, vector<1x24x128xf32>
    %25 = vector.shape_cast %24 : vector<1x24x128xf32> to vector<24x128xf32>
    %26 = vector.shape_cast %23 : vector<24x128xf32> to vector<1x24x128xf32>
    tpu.vector_store %arg8[%c0_25, %c0_26, %c0_27], %26 {strides = array<i32>} : memref<2x24x128xf32, #tpu.memory_space<vmem>>, vector<1x24x128xf32>,
    %27 = vector.extract_strided_slice %22 {offsets = [0, 128], sizes = [24, 128], strides = [1, 1]} : vector<24x256xf32> to vector<24x128xf32>
    %c1 = arith.constant 1 : index
    %c0_28 = arith.constant 0 : index
    %c0_29 = arith.constant 0 : index
    %28 = vector.load %arg8[%c1, %c0_28, %c0_29] : memref<2x24x128xf32, #tpu.memory_space<vmem>>, vector<1x24x128xf32>
    %29 = vector.shape_cast %28 : vector<1x24x128xf32> to vector<24x128xf32>
    %30 = vector.shape_cast %27 : vector<24x128xf32> to vector<1x24x128xf32>
    tpu.vector_store %arg8[%c1, %c0_28, %c0_29], %30 {strides = array<i32>} : memref<2x24x128xf32, #tpu.memory_space<vmem>>, vector<1x24x128xf32>,
    return
  }
  func.func @transform_0(%arg0: i32) -> (i32, i32) {
    %c0_i32 = arith.constant 0 : i32
    %c0_i32_0 = arith.constant 0 : i32
    return %arg0, %c0_i32 : i32, i32
  }
  func.func @transform_1(%arg0: i32) -> (i32, i32) {
    %c0_i32 = arith.constant 0 : i32
    %c0_i32_0 = arith.constant 0 : i32
    return %arg0, %c0_i32 : i32, i32
  }
  func.func @transform_2(%arg0: i32) -> (i32, i32) {
    %c0_i32 = arith.constant 0 : i32
    %c0_i32_0 = arith.constant 0 : i32
    return %arg0, %c0_i32 : i32, i32
  }
  func.func @transform_3(%arg0: i32) -> (i32, i32) {
    %c0_i32 = arith.constant 0 : i32
    %c0_i32_0 = arith.constant 0 : i32
    return %arg0, %c0_i32 : i32, i32
  }
  func.func @transform_4(%arg0: i32) -> (i32, i32) {
    %c0_i32 = arith.constant 0 : i32
    %c0_i32_0 = arith.constant 0 : i32
    %c0_i32_1 = arith.constant 0 : i32
    return %c0_i32, %c0_i32_0 : i32, i32
  }
  func.func @transform_5(%arg0: i32) -> (i32, i32) {
    %c0_i32 = arith.constant 0 : i32
    %c0_i32_0 = arith.constant 0 : i32
    %c0_i32_1 = arith.constant 0 : i32
    return %c0_i32, %c0_i32_0 : i32, i32
  }
  func.func @transform_6(%arg0: i32) -> (i32, i32) {
    %c0_i32 = arith.constant 0 : i32
    %c0_i32_0 = arith.constant 0 : i32
    %c0_i32_1 = arith.constant 0 : i32
    return %c0_i32, %c0_i32_0 : i32, i32
  }
  func.func @transform_7(%arg0: i32) -> (i32, i32, i32) {
    %c0_i32 = arith.constant 0 : i32
    %c0_i32_0 = arith.constant 0 : i32
    %c0_i32_1 = arith.constant 0 : i32
    return %arg0, %c0_i32, %c0_i32_0 : i32, i32, i32
  }
}

module attributes {stable_mosaic.version = 11 : i64} {
  func.func @_sfb2d_kernel(%arg0: i32, %arg1: memref<64x8xf32, #tpu.memory_space<vmem>>, %arg2: memref<64x8xf32, #tpu.memory_space<vmem>>, %arg3: memref<64x8xf32, #tpu.memory_space<vmem>>, %arg4: memref<64x8xf32, #tpu.memory_space<vmem>>, %arg5: memref<8x128xf32, #tpu.memory_space<vmem>>, %arg6: memref<8x128xf32, #tpu.memory_space<vmem>>, %arg7: memref<16x16xf32, #tpu.memory_space<vmem>>, %arg8: memref<8x16x128xf32, #tpu.memory_space<vmem>>, %arg9: memref<16x1024xf32, #tpu.memory_space<vmem>>) attributes {dimension_semantics = [#tpu.dimension_semantics<parallel>], iteration_bounds = array<i64: 1>, scalar_prefetch = 0 : i64, scratch_operands = 1 : i64, tpu.core_type = #tpu.core_type<tc>, window_params = [{transform_indices = @transform_0, window_bounds = array<i64: 64, 8>}, {transform_indices = @transform_1, window_bounds = array<i64: 64, 8>}, {transform_indices = @transform_2, window_bounds = array<i64: 64, 8>}, {transform_indices = @transform_3, window_bounds = array<i64: 64, 8>}, {pipeline_mode = #tpu.pipeline_mode<synchronous>, transform_indices = @transform_4, window_bounds = array<i64: 8, 128>}, {pipeline_mode = #tpu.pipeline_mode<synchronous>, transform_indices = @transform_5, window_bounds = array<i64: 8, 128>}, {pipeline_mode = #tpu.pipeline_mode<synchronous>, transform_indices = @transform_6, window_bounds = array<i64: 16, 16>}, {transform_indices = @transform_7, window_bounds = array<i64: 8, 16, 128>}]} {
    %c0 = arith.constant 0 : index
    %c0_0 = arith.constant 0 : index
    %0 = vector.load %arg5[%c0, %c0_0] : memref<8x128xf32, #tpu.memory_space<vmem>>, vector<8x128xf32>
    %c0_1 = arith.constant 0 : index
    %c0_2 = arith.constant 0 : index
    %1 = vector.load %arg6[%c0_1, %c0_2] : memref<8x128xf32, #tpu.memory_space<vmem>>, vector<8x128xf32>
    %c0_3 = arith.constant 0 : index
    %c0_4 = arith.constant 0 : index
    %2 = vector.load %arg1[%c0_3, %c0_4] : memref<64x8xf32, #tpu.memory_space<vmem>>, vector<64x8xf32>
    %cst = arith.constant dense<0.000000e+00> : vector<64x128xf32>
    %3 = tpu.matmul %2, %0, %cst {dimension_numbers = #tpu.dot_dimension_numbers<[1], [0], [0], [1], [0, 0, 1, 1], [], []>} : vector<64x8xf32>, vector<8x128xf32>, vector<64x128xf32> -> vector<64x128xf32>
    %c0_5 = arith.constant 0 : index
    %c0_6 = arith.constant 0 : index
    %4 = vector.load %arg3[%c0_5, %c0_6] : memref<64x8xf32, #tpu.memory_space<vmem>>, vector<64x8xf32>
    %cst_7 = arith.constant dense<0.000000e+00> : vector<64x128xf32>
    %5 = tpu.matmul %4, %1, %cst_7 {dimension_numbers = #tpu.dot_dimension_numbers<[1], [0], [0], [1], [0, 0, 1, 1], [], []>} : vector<64x8xf32>, vector<8x128xf32>, vector<64x128xf32> -> vector<64x128xf32>
    %6 = arith.addf %3, %5 : vector<64x128xf32>
    %c0_8 = arith.constant 0 : index
    %c0_9 = arith.constant 0 : index
    %7 = vector.load %arg2[%c0_8, %c0_9] : memref<64x8xf32, #tpu.memory_space<vmem>>, vector<64x8xf32>
    %cst_10 = arith.constant dense<0.000000e+00> : vector<64x128xf32>
    %8 = tpu.matmul %7, %0, %cst_10 {dimension_numbers = #tpu.dot_dimension_numbers<[1], [0], [0], [1], [0, 0, 1, 1], [], []>} : vector<64x8xf32>, vector<8x128xf32>, vector<64x128xf32> -> vector<64x128xf32>
    %c0_11 = arith.constant 0 : index
    %c0_12 = arith.constant 0 : index
    %9 = vector.load %arg4[%c0_11, %c0_12] : memref<64x8xf32, #tpu.memory_space<vmem>>, vector<64x8xf32>
    %cst_13 = arith.constant dense<0.000000e+00> : vector<64x128xf32>
    %10 = tpu.matmul %9, %1, %cst_13 {dimension_numbers = #tpu.dot_dimension_numbers<[1], [0], [0], [1], [0, 0, 1, 1], [], []>} : vector<64x8xf32>, vector<8x128xf32>, vector<64x128xf32> -> vector<64x128xf32>
    %11 = arith.addf %8, %10 : vector<64x128xf32>
    %12 = vector.extract_strided_slice %6 {offsets = [0, 0], sizes = [8, 128], strides = [1, 1]} : vector<64x128xf32> to vector<8x128xf32>
    %c0_14 = arith.constant 0 : index
    %c0_15 = arith.constant 0 : index
    %13 = vector.load %arg9[%c0_14, %c0_15] : memref<16x1024xf32, #tpu.memory_space<vmem>>, vector<8x128xf32>
    tpu.vector_store %arg9[%c0_14, %c0_15], %12 {strides = array<i32>} : memref<16x1024xf32, #tpu.memory_space<vmem>>, vector<8x128xf32>,
    %14 = vector.extract_strided_slice %11 {offsets = [0, 0], sizes = [8, 128], strides = [1, 1]} : vector<64x128xf32> to vector<8x128xf32>
    %c8 = arith.constant 8 : index
    %c0_16 = arith.constant 0 : index
    %15 = vector.load %arg9[%c8, %c0_16] : memref<16x1024xf32, #tpu.memory_space<vmem>>, vector<8x128xf32>
    tpu.vector_store %arg9[%c8, %c0_16], %14 {strides = array<i32>} : memref<16x1024xf32, #tpu.memory_space<vmem>>, vector<8x128xf32>,
    %16 = vector.extract_strided_slice %6 {offsets = [8, 0], sizes = [8, 128], strides = [1, 1]} : vector<64x128xf32> to vector<8x128xf32>
    %c0_17 = arith.constant 0 : index
    %c128 = arith.constant 128 : index
    %17 = vector.load %arg9[%c0_17, %c128] : memref<16x1024xf32, #tpu.memory_space<vmem>>, vector<8x128xf32>
    tpu.vector_store %arg9[%c0_17, %c128], %16 {strides = array<i32>} : memref<16x1024xf32, #tpu.memory_space<vmem>>, vector<8x128xf32>,
    %18 = vector.extract_strided_slice %11 {offsets = [8, 0], sizes = [8, 128], strides = [1, 1]} : vector<64x128xf32> to vector<8x128xf32>
    %c8_18 = arith.constant 8 : index
    %c128_19 = arith.constant 128 : index
    %19 = vector.load %arg9[%c8_18, %c128_19] : memref<16x1024xf32, #tpu.memory_space<vmem>>, vector<8x128xf32>
    tpu.vector_store %arg9[%c8_18, %c128_19], %18 {strides = array<i32>} : memref<16x1024xf32, #tpu.memory_space<vmem>>, vector<8x128xf32>,
    %20 = vector.extract_strided_slice %6 {offsets = [16, 0], sizes = [8, 128], strides = [1, 1]} : vector<64x128xf32> to vector<8x128xf32>
    %c0_20 = arith.constant 0 : index
    %c256 = arith.constant 256 : index
    %21 = vector.load %arg9[%c0_20, %c256] : memref<16x1024xf32, #tpu.memory_space<vmem>>, vector<8x128xf32>
    tpu.vector_store %arg9[%c0_20, %c256], %20 {strides = array<i32>} : memref<16x1024xf32, #tpu.memory_space<vmem>>, vector<8x128xf32>,
    %22 = vector.extract_strided_slice %11 {offsets = [16, 0], sizes = [8, 128], strides = [1, 1]} : vector<64x128xf32> to vector<8x128xf32>
    %c8_21 = arith.constant 8 : index
    %c256_22 = arith.constant 256 : index
    %23 = vector.load %arg9[%c8_21, %c256_22] : memref<16x1024xf32, #tpu.memory_space<vmem>>, vector<8x128xf32>
    tpu.vector_store %arg9[%c8_21, %c256_22], %22 {strides = array<i32>} : memref<16x1024xf32, #tpu.memory_space<vmem>>, vector<8x128xf32>,
    %24 = vector.extract_strided_slice %6 {offsets = [24, 0], sizes = [8, 128], strides = [1, 1]} : vector<64x128xf32> to vector<8x128xf32>
    %c0_23 = arith.constant 0 : index
    %c384 = arith.constant 384 : index
    %25 = vector.load %arg9[%c0_23, %c384] : memref<16x1024xf32, #tpu.memory_space<vmem>>, vector<8x128xf32>
    tpu.vector_store %arg9[%c0_23, %c384], %24 {strides = array<i32>} : memref<16x1024xf32, #tpu.memory_space<vmem>>, vector<8x128xf32>,
    %26 = vector.extract_strided_slice %11 {offsets = [24, 0], sizes = [8, 128], strides = [1, 1]} : vector<64x128xf32> to vector<8x128xf32>
    %c8_24 = arith.constant 8 : index
    %c384_25 = arith.constant 384 : index
    %27 = vector.load %arg9[%c8_24, %c384_25] : memref<16x1024xf32, #tpu.memory_space<vmem>>, vector<8x128xf32>
    tpu.vector_store %arg9[%c8_24, %c384_25], %26 {strides = array<i32>} : memref<16x1024xf32, #tpu.memory_space<vmem>>, vector<8x128xf32>,
    %28 = vector.extract_strided_slice %6 {offsets = [32, 0], sizes = [8, 128], strides = [1, 1]} : vector<64x128xf32> to vector<8x128xf32>
    %c0_26 = arith.constant 0 : index
    %c512 = arith.constant 512 : index
    %29 = vector.load %arg9[%c0_26, %c512] : memref<16x1024xf32, #tpu.memory_space<vmem>>, vector<8x128xf32>
    tpu.vector_store %arg9[%c0_26, %c512], %28 {strides = array<i32>} : memref<16x1024xf32, #tpu.memory_space<vmem>>, vector<8x128xf32>,
    %30 = vector.extract_strided_slice %11 {offsets = [32, 0], sizes = [8, 128], strides = [1, 1]} : vector<64x128xf32> to vector<8x128xf32>
    %c8_27 = arith.constant 8 : index
    %c512_28 = arith.constant 512 : index
    %31 = vector.load %arg9[%c8_27, %c512_28] : memref<16x1024xf32, #tpu.memory_space<vmem>>, vector<8x128xf32>
    tpu.vector_store %arg9[%c8_27, %c512_28], %30 {strides = array<i32>} : memref<16x1024xf32, #tpu.memory_space<vmem>>, vector<8x128xf32>,
    %32 = vector.extract_strided_slice %6 {offsets = [40, 0], sizes = [8, 128], strides = [1, 1]} : vector<64x128xf32> to vector<8x128xf32>
    %c0_29 = arith.constant 0 : index
    %c640 = arith.constant 640 : index
    %33 = vector.load %arg9[%c0_29, %c640] : memref<16x1024xf32, #tpu.memory_space<vmem>>, vector<8x128xf32>
    tpu.vector_store %arg9[%c0_29, %c640], %32 {strides = array<i32>} : memref<16x1024xf32, #tpu.memory_space<vmem>>, vector<8x128xf32>,
    %34 = vector.extract_strided_slice %11 {offsets = [40, 0], sizes = [8, 128], strides = [1, 1]} : vector<64x128xf32> to vector<8x128xf32>
    %c8_30 = arith.constant 8 : index
    %c640_31 = arith.constant 640 : index
    %35 = vector.load %arg9[%c8_30, %c640_31] : memref<16x1024xf32, #tpu.memory_space<vmem>>, vector<8x128xf32>
    tpu.vector_store %arg9[%c8_30, %c640_31], %34 {strides = array<i32>} : memref<16x1024xf32, #tpu.memory_space<vmem>>, vector<8x128xf32>,
    %36 = vector.extract_strided_slice %6 {offsets = [48, 0], sizes = [8, 128], strides = [1, 1]} : vector<64x128xf32> to vector<8x128xf32>
    %c0_32 = arith.constant 0 : index
    %c768 = arith.constant 768 : index
    %37 = vector.load %arg9[%c0_32, %c768] : memref<16x1024xf32, #tpu.memory_space<vmem>>, vector<8x128xf32>
    tpu.vector_store %arg9[%c0_32, %c768], %36 {strides = array<i32>} : memref<16x1024xf32, #tpu.memory_space<vmem>>, vector<8x128xf32>,
    %38 = vector.extract_strided_slice %11 {offsets = [48, 0], sizes = [8, 128], strides = [1, 1]} : vector<64x128xf32> to vector<8x128xf32>
    %c8_33 = arith.constant 8 : index
    %c768_34 = arith.constant 768 : index
    %39 = vector.load %arg9[%c8_33, %c768_34] : memref<16x1024xf32, #tpu.memory_space<vmem>>, vector<8x128xf32>
    tpu.vector_store %arg9[%c8_33, %c768_34], %38 {strides = array<i32>} : memref<16x1024xf32, #tpu.memory_space<vmem>>, vector<8x128xf32>,
    %40 = vector.extract_strided_slice %6 {offsets = [56, 0], sizes = [8, 128], strides = [1, 1]} : vector<64x128xf32> to vector<8x128xf32>
    %c0_35 = arith.constant 0 : index
    %c896 = arith.constant 896 : index
    %41 = vector.load %arg9[%c0_35, %c896] : memref<16x1024xf32, #tpu.memory_space<vmem>>, vector<8x128xf32>
    tpu.vector_store %arg9[%c0_35, %c896], %40 {strides = array<i32>} : memref<16x1024xf32, #tpu.memory_space<vmem>>, vector<8x128xf32>,
    %42 = vector.extract_strided_slice %11 {offsets = [56, 0], sizes = [8, 128], strides = [1, 1]} : vector<64x128xf32> to vector<8x128xf32>
    %c8_36 = arith.constant 8 : index
    %c896_37 = arith.constant 896 : index
    %43 = vector.load %arg9[%c8_36, %c896_37] : memref<16x1024xf32, #tpu.memory_space<vmem>>, vector<8x128xf32>
    tpu.vector_store %arg9[%c8_36, %c896_37], %42 {strides = array<i32>} : memref<16x1024xf32, #tpu.memory_space<vmem>>, vector<8x128xf32>,
    %c0_38 = arith.constant 0 : index
    %c0_39 = arith.constant 0 : index
    %44 = vector.load %arg7[%c0_38, %c0_39] : memref<16x16xf32, #tpu.memory_space<vmem>>, vector<16x16xf32>
    %c0_40 = arith.constant 0 : index
    %c0_41 = arith.constant 0 : index
    %45 = vector.load %arg9[%c0_40, %c0_41] : memref<16x1024xf32, #tpu.memory_space<vmem>>, vector<16x1024xf32>
    %cst_42 = arith.constant dense<0.000000e+00> : vector<16x1024xf32>
    %46 = tpu.matmul %44, %45, %cst_42 {dimension_numbers = #tpu.dot_dimension_numbers<[1], [0], [0], [1], [0, 0, 1, 1], [], []>} : vector<16x16xf32>, vector<16x1024xf32>, vector<16x1024xf32> -> vector<16x1024xf32>
    %47 = vector.extract_strided_slice %46 {offsets = [0, 0], sizes = [16, 128], strides = [1, 1]} : vector<16x1024xf32> to vector<16x128xf32>
    %c0_43 = arith.constant 0 : index
    %c0_44 = arith.constant 0 : index
    %c0_45 = arith.constant 0 : index
    %48 = vector.load %arg8[%c0_43, %c0_44, %c0_45] : memref<8x16x128xf32, #tpu.memory_space<vmem>>, vector<1x16x128xf32>
    %49 = vector.shape_cast %48 : vector<1x16x128xf32> to vector<16x128xf32>
    %50 = vector.shape_cast %47 : vector<16x128xf32> to vector<1x16x128xf32>
    tpu.vector_store %arg8[%c0_43, %c0_44, %c0_45], %50 {strides = array<i32>} : memref<8x16x128xf32, #tpu.memory_space<vmem>>, vector<1x16x128xf32>,
    %51 = vector.extract_strided_slice %46 {offsets = [0, 128], sizes = [16, 128], strides = [1, 1]} : vector<16x1024xf32> to vector<16x128xf32>
    %c1 = arith.constant 1 : index
    %c0_46 = arith.constant 0 : index
    %c0_47 = arith.constant 0 : index
    %52 = vector.load %arg8[%c1, %c0_46, %c0_47] : memref<8x16x128xf32, #tpu.memory_space<vmem>>, vector<1x16x128xf32>
    %53 = vector.shape_cast %52 : vector<1x16x128xf32> to vector<16x128xf32>
    %54 = vector.shape_cast %51 : vector<16x128xf32> to vector<1x16x128xf32>
    tpu.vector_store %arg8[%c1, %c0_46, %c0_47], %54 {strides = array<i32>} : memref<8x16x128xf32, #tpu.memory_space<vmem>>, vector<1x16x128xf32>,
    %55 = vector.extract_strided_slice %46 {offsets = [0, 256], sizes = [16, 128], strides = [1, 1]} : vector<16x1024xf32> to vector<16x128xf32>
    %c2 = arith.constant 2 : index
    %c0_48 = arith.constant 0 : index
    %c0_49 = arith.constant 0 : index
    %56 = vector.load %arg8[%c2, %c0_48, %c0_49] : memref<8x16x128xf32, #tpu.memory_space<vmem>>, vector<1x16x128xf32>
    %57 = vector.shape_cast %56 : vector<1x16x128xf32> to vector<16x128xf32>
    %58 = vector.shape_cast %55 : vector<16x128xf32> to vector<1x16x128xf32>
    tpu.vector_store %arg8[%c2, %c0_48, %c0_49], %58 {strides = array<i32>} : memref<8x16x128xf32, #tpu.memory_space<vmem>>, vector<1x16x128xf32>,
    %59 = vector.extract_strided_slice %46 {offsets = [0, 384], sizes = [16, 128], strides = [1, 1]} : vector<16x1024xf32> to vector<16x128xf32>
    %c3 = arith.constant 3 : index
    %c0_50 = arith.constant 0 : index
    %c0_51 = arith.constant 0 : index
    %60 = vector.load %arg8[%c3, %c0_50, %c0_51] : memref<8x16x128xf32, #tpu.memory_space<vmem>>, vector<1x16x128xf32>
    %61 = vector.shape_cast %60 : vector<1x16x128xf32> to vector<16x128xf32>
    %62 = vector.shape_cast %59 : vector<16x128xf32> to vector<1x16x128xf32>
    tpu.vector_store %arg8[%c3, %c0_50, %c0_51], %62 {strides = array<i32>} : memref<8x16x128xf32, #tpu.memory_space<vmem>>, vector<1x16x128xf32>,
    %63 = vector.extract_strided_slice %46 {offsets = [0, 512], sizes = [16, 128], strides = [1, 1]} : vector<16x1024xf32> to vector<16x128xf32>
    %c4 = arith.constant 4 : index
    %c0_52 = arith.constant 0 : index
    %c0_53 = arith.constant 0 : index
    %64 = vector.load %arg8[%c4, %c0_52, %c0_53] : memref<8x16x128xf32, #tpu.memory_space<vmem>>, vector<1x16x128xf32>
    %65 = vector.shape_cast %64 : vector<1x16x128xf32> to vector<16x128xf32>
    %66 = vector.shape_cast %63 : vector<16x128xf32> to vector<1x16x128xf32>
    tpu.vector_store %arg8[%c4, %c0_52, %c0_53], %66 {strides = array<i32>} : memref<8x16x128xf32, #tpu.memory_space<vmem>>, vector<1x16x128xf32>,
    %67 = vector.extract_strided_slice %46 {offsets = [0, 640], sizes = [16, 128], strides = [1, 1]} : vector<16x1024xf32> to vector<16x128xf32>
    %c5 = arith.constant 5 : index
    %c0_54 = arith.constant 0 : index
    %c0_55 = arith.constant 0 : index
    %68 = vector.load %arg8[%c5, %c0_54, %c0_55] : memref<8x16x128xf32, #tpu.memory_space<vmem>>, vector<1x16x128xf32>
    %69 = vector.shape_cast %68 : vector<1x16x128xf32> to vector<16x128xf32>
    %70 = vector.shape_cast %67 : vector<16x128xf32> to vector<1x16x128xf32>
    tpu.vector_store %arg8[%c5, %c0_54, %c0_55], %70 {strides = array<i32>} : memref<8x16x128xf32, #tpu.memory_space<vmem>>, vector<1x16x128xf32>,
    %71 = vector.extract_strided_slice %46 {offsets = [0, 768], sizes = [16, 128], strides = [1, 1]} : vector<16x1024xf32> to vector<16x128xf32>
    %c6 = arith.constant 6 : index
    %c0_56 = arith.constant 0 : index
    %c0_57 = arith.constant 0 : index
    %72 = vector.load %arg8[%c6, %c0_56, %c0_57] : memref<8x16x128xf32, #tpu.memory_space<vmem>>, vector<1x16x128xf32>
    %73 = vector.shape_cast %72 : vector<1x16x128xf32> to vector<16x128xf32>
    %74 = vector.shape_cast %71 : vector<16x128xf32> to vector<1x16x128xf32>
    tpu.vector_store %arg8[%c6, %c0_56, %c0_57], %74 {strides = array<i32>} : memref<8x16x128xf32, #tpu.memory_space<vmem>>, vector<1x16x128xf32>,
    %75 = vector.extract_strided_slice %46 {offsets = [0, 896], sizes = [16, 128], strides = [1, 1]} : vector<16x1024xf32> to vector<16x128xf32>
    %c7 = arith.constant 7 : index
    %c0_58 = arith.constant 0 : index
    %c0_59 = arith.constant 0 : index
    %76 = vector.load %arg8[%c7, %c0_58, %c0_59] : memref<8x16x128xf32, #tpu.memory_space<vmem>>, vector<1x16x128xf32>
    %77 = vector.shape_cast %76 : vector<1x16x128xf32> to vector<16x128xf32>
    %78 = vector.shape_cast %75 : vector<16x128xf32> to vector<1x16x128xf32>
    tpu.vector_store %arg8[%c7, %c0_58, %c0_59], %78 {strides = array<i32>} : memref<8x16x128xf32, #tpu.memory_space<vmem>>, vector<1x16x128xf32>,
    return
  }
  func.func @transform_0(%arg0: i32) -> (i32, i32) {
    %c0_i32 = arith.constant 0 : i32
    %c0_i32_0 = arith.constant 0 : i32
    return %arg0, %c0_i32 : i32, i32
  }
  func.func @transform_1(%arg0: i32) -> (i32, i32) {
    %c0_i32 = arith.constant 0 : i32
    %c0_i32_0 = arith.constant 0 : i32
    return %arg0, %c0_i32 : i32, i32
  }
  func.func @transform_2(%arg0: i32) -> (i32, i32) {
    %c0_i32 = arith.constant 0 : i32
    %c0_i32_0 = arith.constant 0 : i32
    return %arg0, %c0_i32 : i32, i32
  }
  func.func @transform_3(%arg0: i32) -> (i32, i32) {
    %c0_i32 = arith.constant 0 : i32
    %c0_i32_0 = arith.constant 0 : i32
    return %arg0, %c0_i32 : i32, i32
  }
  func.func @transform_4(%arg0: i32) -> (i32, i32) {
    %c0_i32 = arith.constant 0 : i32
    %c0_i32_0 = arith.constant 0 : i32
    %c0_i32_1 = arith.constant 0 : i32
    return %c0_i32, %c0_i32_0 : i32, i32
  }
  func.func @transform_5(%arg0: i32) -> (i32, i32) {
    %c0_i32 = arith.constant 0 : i32
    %c0_i32_0 = arith.constant 0 : i32
    %c0_i32_1 = arith.constant 0 : i32
    return %c0_i32, %c0_i32_0 : i32, i32
  }
  func.func @transform_6(%arg0: i32) -> (i32, i32) {
    %c0_i32 = arith.constant 0 : i32
    %c0_i32_0 = arith.constant 0 : i32
    %c0_i32_1 = arith.constant 0 : i32
    return %c0_i32, %c0_i32_0 : i32, i32
  }
  func.func @transform_7(%arg0: i32) -> (i32, i32, i32) {
    %c0_i32 = arith.constant 0 : i32
    %c0_i32_0 = arith.constant 0 : i32
    %c0_i32_1 = arith.constant 0 : i32
    return %arg0, %c0_i32, %c0_i32_0 : i32, i32, i32
  }
}

</mosaic_0001>

<llo_original>
// kernel: _forward_impl.3
$region0: #{_forward_impl.3}
  #allocation0 [shape = 'u32[]', space=smem, size = 0x4, offset = 0x4, fixed_abs, tag = 'smem constant byte address 0x4 - core index']
  #allocation1 [shape = 'u32[72,128]{1,0:T(1,128)}', space=vmem, size = 0x9000, scoped, tag = 'internal scratch']
  #allocation2 [shape = 'f32[32,256]{1,0:T(8,128)}', space=vmem, size = 0x8000, scoped, tag = 'scratch operand']
  %s0 = inlined_call_operand.vmem [shape: f32[32,12], index: 0, kind: input, shape index: {}]
  %s1 = inlined_call_operand.vmem [shape: f32[32,12], index: 1, kind: input, shape index: {}]
  %s2 = inlined_call_operand.vmem [shape: f32[32,12], index: 2, kind: input, shape index: {}]
  %s3 = inlined_call_operand.vmem [shape: f32[32,12], index: 3, kind: input, shape index: {}]
  %s4 = inlined_call_operand.vmem [shape: f32[12,128], index: 4, kind: input, shape index: {}]
  %s5 = inlined_call_operand.vmem [shape: f32[12,128], index: 5, kind: input, shape index: {}]
  %s6 = inlined_call_operand.vmem [shape: f32[24,32], index: 6, kind: input, shape index: {}]
  %s7 = inlined_call_operand.vmem [shape: f32[2,24,128], index: 7, kind: output, shape index: {}]
  %s8 = sld [smem:[#allocation0]]
  $region38: #{_forward_impl.3} parent=0
    _
  %s10 = ssub.s32 1, %s8
  %s11 = scalar_select 0, %s10, %s8
  // Predicated region
  $region2: #{_forward_impl.3} parent=0 // pred_check
    _
  $region3: #{_forward_impl.3} parent=0 // pred_check_branch
    %13 = sbr.rel (0) target = $region5
  $region4: #{_forward_impl.3} parent=0 // pred_region
    _
  $region5: #{_forward_impl.3} parent=0 // pred_fallthru
    _
  // Predicated region
  $region6: #{_forward_impl.3} parent=0 // pred_check
    _
  $region7: #{_forward_impl.3} parent=0 // pred_check_branch
    %15 = sbr.rel (0) target = $region9
  $region8: #{_forward_impl.3} parent=0 // pred_region
    _
  $region9: #{_forward_impl.3} parent=0 // pred_fallthru
    _
  // Predicated region
  $region10: #{_forward_impl.3} parent=0 // pred_check
    _
  $region11: #{_forward_impl.3} parent=0 // pred_check_branch
    %17 = sbr.rel (0) target = $region13
  $region12: #{_forward_impl.3} parent=0 // pred_region
    _
  $region13: #{_forward_impl.3} parent=0 // pred_fallthru
    _
  // Predicated region
  $region14: #{_forward_impl.3} parent=0 // pred_check
    _
  $region15: #{_forward_impl.3} parent=0 // pred_check_branch
    %19 = sbr.rel (0) target = $region17
  $region16: #{_forward_impl.3} parent=0 // pred_region
    _
  $region17: #{_forward_impl.3} parent=0 // pred_fallthru
    _
  // Predicated region
  $region18: #{_forward_impl.3} parent=0 // pred_check
    _
  $region19: #{_forward_impl.3} parent=0 // pred_check_branch
    %21 = sbr.rel (0) target = $region21
  $region20: #{_forward_impl.3} parent=0 // pred_region
    _
  $region21: #{_forward_impl.3} parent=0 // pred_fallthru
    _
  // Predicated region
  $region22: #{_forward_impl.3} parent=0 // pred_check
    _
  $region23: #{_forward_impl.3} parent=0 // pred_check_branch
    %23 = sbr.rel (0) target = $region25
  $region24: #{_forward_impl.3} parent=0 // pred_region
    _
  $region25: #{_forward_impl.3} parent=0 // pred_fallthru
    _
  // Predicated region
  $region26: #{_forward_impl.3} parent=0 // pred_check
    _
  $region27: #{_forward_impl.3} parent=0 // pred_check_branch
    %25 = sbr.rel (0) target = $region29
  $region28: #{_forward_impl.3} parent=0 // pred_region
    _
  $region29: #{_forward_impl.3} parent=0 // pred_fallthru
    _
  %v26 = vld [vmem:[%s4] sm:$0xff]
  %v27 = vld [vmem:[%s4 + $0x8] sm:$0xf]
  %v28 = vld [vmem:[%s5] sm:$0xff]
  %v29 = vld [vmem:[%s5 + $0x8] sm:$0xf]
  %v30 = vld [vmem:[%s0] sm:$0xff]
  %v31 = vld [vmem:[%s0 + $0x8] sm:$0xff]
  %v32 = vld [vmem:[%s0 + $0x10] sm:$0xff]
  %v33 = vld [vmem:[%s0 + $0x18] sm:$0xff]
  %v34 = vld [vmem:[%s2] sm:$0xff]
  %v35 = vld [vmem:[%s2 + $0x8] sm:$0xff]
  %v36 = vld [vmem:[%s2 + $0x10] sm:$0xff]
  %v37 = vld [vmem:[%s2 + $0x18] sm:$0xff]
  %vm38 = vcmask 97280
  %v40 = vsel %vm38, %v34, 0
  %v43 = vsel %vm38, %v35, 0
  %v46 = vsel %vm38, %v36, 0
  %v49 = vsel %vm38, %v37, 0
  %vm51 = vcmask 1043456
  %v53 = vsel %vm51, %v29, 0
  %55 = vmatpush.msra.mxu0 0.0
  %56 = vmatpush.msra.mxu0 0.0
  %57 = vmatpush.msra.mxu0 0.0
  %58 = vmatpush.msra.mxu0 0.0
  %59 = vmatpush.msra.mxu0 0.0
  %60 = vmatpush.msra.mxu0 0.0
  %61 = vmatpush.msra.mxu0 0.0
  %62 = vmatpush.msra.mxu0 0.0
  %63 = vmatpush.msra.mxu0 0.0
  %64 = vmatpush.msra.mxu0 0.0
  %65 = vmatpush.msra.mxu0 0.0
  %66 = vmatpush.msra.mxu0 0.0
  %67 = vmatpush.msra.mxu0 0.0
  %68 = vmatpush.msra.mxu0 0.0
  %69 = vmatpush.msra.mxu0 %v53
  %70 = vmatpush.msra.mxu0 %v28
  %71 = vmatmul.f32.gmra.mxu0 %v40
  %v72 = vpop.f32.mrf.mxu0
  %v73 = vadd.f32 0.0, %v72
  %74 = vmatmul.f32.gmra.mxu0 %v43
  %v75 = vpop.f32.mrf.mxu0
  %v76 = vadd.f32 0.0, %v75
  %77 = vmatmul.f32.gmra.mxu0 %v46
  %v78 = vpop.f32.mrf.mxu0
  %v79 = vadd.f32 0.0, %v78
  %80 = vmatmul.f32.gmra.mxu0 %v49
  %v81 = vpop.f32.mrf.mxu0
  %v82 = vadd.f32 0.0, %v81
  %83 = vdwg.mxu0
  %v85 = vsel %vm38, %v30, 0
  %v88 = vsel %vm38, %v31, 0
  %v91 = vsel %vm38, %v32, 0
  %v94 = vsel %vm38, %v33, 0
  %v97 = vsel %vm51, %v27, 0
  %99 = vmatpush.msra.mxu0 0.0
  %100 = vmatpush.msra.mxu0 0.0
  %101 = vmatpush.msra.mxu0 0.0
  %102 = vmatpush.msra.mxu0 0.0
  %103 = vmatpush.msra.mxu0 0.0
  %104 = vmatpush.msra.mxu0 0.0
  %105 = vmatpush.msra.mxu0 0.0
  %106 = vmatpush.msra.mxu0 0.0
  %107 = vmatpush.msra.mxu0 0.0
  %108 = vmatpush.msra.mxu0 0.0
  %109 = vmatpush.msra.mxu0 0.0
  %110 = vmatpush.msra.mxu0 0.0
  %111 = vmatpush.msra.mxu0 0.0
  %112 = vmatpush.msra.mxu0 0.0
  %113 = vmatpush.msra.mxu0 %v97
  %114 = vmatpush.msra.mxu0 %v26
  %115 = vmatmul.f32.gmra.mxu0 %v85
  %v116 = vpop.f32.mrf.mxu0
  %v117 = vadd.f32 %v73, %v116
  %118 = vmatmul.f32.gmra.mxu0 %v88
  %v119 = vpop.f32.mrf.mxu0
  %v120 = vadd.f32 %v76, %v119
  %121 = vmatmul.f32.gmra.mxu0 %v91
  %v122 = vpop.f32.mrf.mxu0
  %v123 = vadd.f32 %v79, %v122
  %124 = vmatmul.f32.gmra.mxu0 %v94
  %v125 = vpop.f32.mrf.mxu0
  %v126 = vadd.f32 %v82, %v125
  %127 = vdwg.mxu0
  %v128 = vld [vmem:[%s1] sm:$0xff]
  %v129 = vld [vmem:[%s1 + $0x8] sm:$0xff]
  %v130 = vld [vmem:[%s1 + $0x10] sm:$0xff]
  %v131 = vld [vmem:[%s1 + $0x18] sm:$0xff]
  %v132 = vld [vmem:[%s3] sm:$0xff]
  %v133 = vld [vmem:[%s3 + $0x8] sm:$0xff]
  %v134 = vld [vmem:[%s3 + $0x10] sm:$0xff]
  %v135 = vld [vmem:[%s3 + $0x18] sm:$0xff]
  %v137 = vsel %vm38, %v132, 0
  %v140 = vsel %vm38, %v133, 0
  %v143 = vsel %vm38, %v134, 0
  %v146 = vsel %vm38, %v135, 0
  %148 = vmatpush.msra.mxu0 0.0
  %149 = vmatpush.msra.mxu0 0.0
  %150 = vmatpush.msra.mxu0 0.0
  %151 = vmatpush.msra.mxu0 0.0
  %152 = vmatpush.msra.mxu0 0.0
  %153 = vmatpush.msra.mxu0 0.0
  %154 = vmatpush.msra.mxu0 0.0
  %155 = vmatpush.msra.mxu0 0.0
  %156 = vmatpush.msra.mxu0 0.0
  %157 = vmatpush.msra.mxu0 0.0
  %158 = vmatpush.msra.mxu0 0.0
  %159 = vmatpush.msra.mxu0 0.0
  %160 = vmatpush.msra.mxu0 0.0
  %161 = vmatpush.msra.mxu0 0.0
  %162 = vmatpush.msra.mxu0 %v53
  %163 = vmatpush.msra.mxu0 %v28
  %164 = vmatmul.f32.gmra.mxu0 %v137
  %v165 = vpop.f32.mrf.mxu0
  %v166 = vadd.f32 0.0, %v165
  %167 = vmatmul.f32.gmra.mxu0 %v140
  %v168 = vpop.f32.mrf.mxu0
  %v169 = vadd.f32 0.0, %v168
  %170 = vmatmul.f32.gmra.mxu0 %v143
  %v171 = vpop.f32.mrf.mxu0
  %v172 = vadd.f32 0.0, %v171
  %173 = vmatmul.f32.gmra.mxu0 %v146
  %v174 = vpop.f32.mrf.mxu0
  %v175 = vadd.f32 0.0, %v174
  %176 = vdwg.mxu0
  %v178 = vsel %vm38, %v128, 0
  %v181 = vsel %vm38, %v129, 0
  %v184 = vsel %vm38, %v130, 0
  %v187 = vsel %vm38, %v131, 0
  %189 = vmatpush.msra.mxu0 0.0
  %190 = vmatpush.msra.mxu0 0.0
  %191 = vmatpush.msra.mxu0 0.0
  %192 = vmatpush.msra.mxu0 0.0
  %193 = vmatpush.msra.mxu0 0.0
  %194 = vmatpush.msra.mxu0 0.0
  %195 = vmatpush.msra.mxu0 0.0
  %196 = vmatpush.msra.mxu0 0.0
  %197 = vmatpush.msra.mxu0 0.0
  %198 = vmatpush.msra.mxu0 0.0
  %199 = vmatpush.msra.mxu0 0.0
  %200 = vmatpush.msra.mxu0 0.0
  %201 = vmatpush.msra.mxu0 0.0
  %202 = vmatpush.msra.mxu0 0.0
  %203 = vmatpush.msra.mxu0 %v97
  %204 = vmatpush.msra.mxu0 %v26
  %205 = vmatmul.f32.gmra.mxu0 %v178
  %v206 = vpop.f32.mrf.mxu0
  %v207 = vadd.f32 %v166, %v206
  %208 = vmatmul.f32.gmra.mxu0 %v181
  %v209 = vpop.f32.mrf.mxu0
  %v210 = vadd.f32 %v169, %v209
  %211 = vmatmul.f32.gmra.mxu0 %v184
  %v212 = vpop.f32.mrf.mxu0
  %v213 = vadd.f32 %v172, %v212
  %214 = vmatmul.f32.gmra.mxu0 %v187
  %v215 = vpop.f32.mrf.mxu0
  %v216 = vadd.f32 %v175, %v215
  %217 = vdwg.mxu0
  %218 = vst [vmem:[#allocation2] sm:$0xff] %v117
  %219 = vst [vmem:[#allocation2 + $0x10] sm:$0xff] %v120
  %220 = vst [vmem:[#allocation2 + $0x20] sm:$0xff] %v207
  %221 = vst [vmem:[#allocation2 + $0x30] sm:$0xff] %v210
  %222 = vst [vmem:[#allocation2 + $0x8] sm:$0xff] %v123
  %223 = vst [vmem:[#allocation2 + $0x18] sm:$0xff] %v126
  %224 = vst [vmem:[#allocation2 + $0x28] sm:$0xff] %v213
  %225 = vst [vmem:[#allocation2 + $0x38] sm:$0xff] %v216
  %v226 = vld [vmem:[%s6] sm:$0xff]
  %v227 = vld [vmem:[%s6 + $0x8] sm:$0xff]
  %v228 = vld [vmem:[%s6 + $0x10] sm:$0xff]
  %v229 = vld [vmem:[#allocation2] sm:$0xff]
  %v230 = vld [vmem:[#allocation2 + $0x8] sm:$0xff]
  %v231 = vld [vmem:[#allocation2 + $0x10] sm:$0xff]
  %v232 = vld [vmem:[#allocation2 + $0x18] sm:$0xff]
  %v233 = vld [vmem:[#allocation2 + $0x20] sm:$0xff]
  %v234 = vld [vmem:[#allocation2 + $0x28] sm:$0xff]
  %v235 = vld [vmem:[#allocation2 + $0x30] sm:$0xff]
  %v236 = vld [vmem:[#allocation2 + $0x38] sm:$0xff]
  %vm237 = vcmask 261120
  %v239 = vsel %vm237, %v226, 0
  %v242 = vsel %vm237, %v227, 0
  %v245 = vsel %vm237, %v228, 0
  %247 = vmatpush.msra.mxu0 0.0
  %248 = vmatpush.msra.mxu0 0.0
  %249 = vmatpush.msra.mxu0 0.0
  %250 = vmatpush.msra.mxu0 0.0
  %251 = vmatpush.msra.mxu0 0.0
  %252 = vmatpush.msra.mxu0 0.0
  %253 = vmatpush.msra.mxu0 0.0
  %254 = vmatpush.msra.mxu0 0.0
  %255 = vmatpush.msra.mxu0 0.0
  %256 = vmatpush.msra.mxu0 0.0
  %257 = vmatpush.msra.mxu0 0.0
  %258 = vmatpush.msra.mxu0 0.0
  %259 = vmatpush.msra.mxu0 %v235
  %260 = vmatpush.msra.mxu0 %v233
  %261 = vmatpush.msra.mxu0 %v231
  %262 = vmatpush.msra.mxu0 %v229
  %263 = vmatmul.f32.gmra.mxu0 %v239
  %v264 = vpop.f32.mrf.mxu0
  %v265 = vadd.f32 0.0, %v264
  %266 = vmatmul.f32.gmra.mxu0 %v242
  %v267 = vpop.f32.mrf.mxu0
  %v268 = vadd.f32 0.0, %v267
  %269 = vmatmul.f32.gmra.mxu0 %v245
  %v270 = vpop.f32.mrf.mxu0
  %v271 = vadd.f32 0.0, %v270
  %272 = vdwg.mxu0
  %273 = vmatpush.msra.mxu0 0.0
  %274 = vmatpush.msra.mxu0 0.0
  %275 = vmatpush.msra.mxu0 0.0
  %276 = vmatpush.msra.mxu0 0.0
  %277 = vmatpush.msra.mxu0 0.0
  %278 = vmatpush.msra.mxu0 0.0
  %279 = vmatpush.msra.mxu0 0.0
  %280 = vmatpush.msra.mxu0 0.0
  %281 = vmatpush.msra.mxu0 0.0
  %282 = vmatpush.msra.mxu0 0.0
  %283 = vmatpush.msra.mxu0 0.0
  %284 = vmatpush.msra.mxu0 0.0
  %285 = vmatpush.msra.mxu0 %v236
  %286 = vmatpush.msra.mxu0 %v234
  %287 = vmatpush.msra.mxu0 %v232
  %288 = vmatpush.msra.mxu0 %v230
  %289 = vmatmul.f32.gmra.mxu0 %v239
  %v290 = vpop.f32.mrf.mxu0
  %v291 = vadd.f32 0.0, %v290
  %292 = vmatmul.f32.gmra.mxu0 %v242
  %v293 = vpop.f32.mrf.mxu0
  %v294 = vadd.f32 0.0, %v293
  %295 = vmatmul.f32.gmra.mxu0 %v245
  %v296 = vpop.f32.mrf.mxu0
  %v297 = vadd.f32 0.0, %v296
  %298 = vdwg.mxu0
  %299 = vst [vmem:[%s7] sm:$0xff] %v265
  %300 = vst [vmem:[%s7 + $0x8] sm:$0xff] %v268
  %301 = vst [vmem:[%s7 + $0x10] sm:$0xff] %v271
  %s302 = scalar_lea.vmem %s7, 24
  %303 = vst [vmem:[%s302] sm:$0xff] %v291
  %304 = vst [vmem:[%s302 + $0x8] sm:$0xff] %v294
  %305 = vst [vmem:[%s302 + $0x10] sm:$0xff] %v297
  // Predicated region
  $region30: #{_forward_impl.3} parent=0 // pred_check
    _
  $region31: #{_forward_impl.3} parent=0 // pred_check_branch
    %307 = sbr.rel (0) target = $region33
  $region32: #{_forward_impl.3} parent=0 // pred_region
    _
  $region33: #{_forward_impl.3} parent=0 // pred_fallthru
    _
  // Predicated region
  $region34: #{_forward_impl.3} parent=0 // pred_check
    _
  $region35: #{_forward_impl.3} parent=0 // pred_check_branch
    %309 = sbr.rel (0) target = $region37
  $region36: #{_forward_impl.3} parent=0 // pred_region
    _
  $region37: #{_forward_impl.3} parent=0 // pred_fallthru
    _

// kernel: _forward_impl.2
$region0: #{_forward_impl.2}
  #allocation0 [shape = 'u32[]', space=smem, size = 0x4, offset = 0x4, fixed_abs, tag = 'smem constant byte address 0x4 - core index']
  #allocation1 [shape = 'u32[72,128]{1,0:T(1,128)}', space=vmem, size = 0x9000, scoped, tag = 'internal scratch']
  #allocation2 [shape = 'f32[16,1024]{1,0:T(8,128)}', space=vmem, size = 0x10000, scoped, tag = 'scratch operand']
  %s0 = inlined_call_operand.vmem [shape: f32[64,8], index: 0, kind: input, shape index: {}]
  %s1 = inlined_call_operand.vmem [shape: f32[64,8], index: 1, kind: input, shape index: {}]
  %s2 = inlined_call_operand.vmem [shape: f32[64,8], index: 2, kind: input, shape index: {}]
  %s3 = inlined_call_operand.vmem [shape: f32[64,8], index: 3, kind: input, shape index: {}]
  %s4 = inlined_call_operand.vmem [shape: f32[8,128], index: 4, kind: input, shape index: {}]
  %s5 = inlined_call_operand.vmem [shape: f32[8,128], index: 5, kind: input, shape index: {}]
  %s6 = inlined_call_operand.vmem [shape: f32[16,16], index: 6, kind: input, shape index: {}]
  %s7 = inlined_call_operand.vmem [shape: f32[8,16,128], index: 7, kind: output, shape index: {}]
  %s8 = sld [smem:[#allocation0]]
  $region38: #{_forward_impl.2} parent=0
    _
  %s10 = ssub.s32 1, %s8
  %s11 = scalar_select 0, %s10, %s8
  // Predicated region
  $region2: #{_forward_impl.2} parent=0 // pred_check
    _
  $region3: #{_forward_impl.2} parent=0 // pred_check_branch
    %13 = sbr.rel (0) target = $region5
  $region4: #{_forward_impl.2} parent=0 // pred_region
    _
  $region5: #{_forward_impl.2} parent=0 // pred_fallthru
    _
  // Predicated region
  $region6: #{_forward_impl.2} parent=0 // pred_check
    _
  $region7: #{_forward_impl.2} parent=0 // pred_check_branch
    %15 = sbr.rel (0) target = $region9
  $region8: #{_forward_impl.2} parent=0 // pred_region
    _
  $region9: #{_forward_impl.2} parent=0 // pred_fallthru
    _
  // Predicated region
  $region10: #{_forward_impl.2} parent=0 // pred_check
    _
  $region11: #{_forward_impl.2} parent=0 // pred_check_branch
    %17 = sbr.rel (0) target = $region13
  $region12: #{_forward_impl.2} parent=0 // pred_region
    _
  $region13: #{_forward_impl.2} parent=0 // pred_fallthru
    _
  // Predicated region
  $region14: #{_forward_impl.2} parent=0 // pred_check
    _
  $region15: #{_forward_impl.2} parent=0 // pred_check_branch
    %19 = sbr.rel (0) target = $region17
  $region16: #{_forward_impl.2} parent=0 // pred_region
    _
  $region17: #{_forward_impl.2} parent=0 // pred_fallthru
    _
  // Predicated region
  $region18: #{_forward_impl.2} parent=0 // pred_check
    _
  $region19: #{_forward_impl.2} parent=0 // pred_check_branch
    %21 = sbr.rel (0) target = $region21
  $region20: #{_forward_impl.2} parent=0 // pred_region
    _
  $region21: #{_forward_impl.2} parent=0 // pred_fallthru
    _
  // Predicated region
  $region22: #{_forward_impl.2} parent=0 // pred_check
    _
  $region23: #{_forward_impl.2} parent=0 // pred_check_branch
    %23 = sbr.rel (0) target = $region25
  $region24: #{_forward_impl.2} parent=0 // pred_region
    _
  $region25: #{_forward_impl.2} parent=0 // pred_fallthru
    _
  // Predicated region
  $region26: #{_forward_impl.2} parent=0 // pred_check
    _
  $region27: #{_forward_impl.2} parent=0 // pred_check_branch
    %25 = sbr.rel (0) target = $region29
  $region28: #{_forward_impl.2} parent=0 // pred_region
    _
  $region29: #{_forward_impl.2} parent=0 // pred_fallthru
    _
  %v26 = vld [vmem:[%s4] sm:$0xff]
  %v27 = vld [vmem:[%s5] sm:$0xff]
  %v28 = vld [vmem:[%s0] sm:$0xff]
  %v29 = vld [vmem:[%s0 + $0x8] sm:$0xff]
  %v30 = vld [vmem:[%s0 + $0x10] sm:$0xff]
  %v31 = vld [vmem:[%s0 + $0x18] sm:$0xff]
  %v32 = vld [vmem:[%s0 + $0x20] sm:$0xff]
  %v33 = vld [vmem:[%s0 + $0x28] sm:$0xff]
  %v34 = vld [vmem:[%s0 + $0x30] sm:$0xff]
  %v35 = vld [vmem:[%s0 + $0x38] sm:$0xff]
  %v36 = vld [vmem:[%s2] sm:$0xff]
  %v37 = vld [vmem:[%s2 + $0x8] sm:$0xff]
  %v38 = vld [vmem:[%s2 + $0x10] sm:$0xff]
  %v39 = vld [vmem:[%s2 + $0x18] sm:$0xff]
  %v40 = vld [vmem:[%s2 + $0x20] sm:$0xff]
  %v41 = vld [vmem:[%s2 + $0x28] sm:$0xff]
  %v42 = vld [vmem:[%s2 + $0x30] sm:$0xff]
  %v43 = vld [vmem:[%s2 + $0x38] sm:$0xff]
  %vm44 = vcmask 64512
  %v46 = vsel %vm44, %v36, 0
  %v49 = vsel %vm44, %v37, 0
  %v52 = vsel %vm44, %v38, 0
  %v55 = vsel %vm44, %v39, 0
  %v58 = vsel %vm44, %v40, 0
  %v61 = vsel %vm44, %v41, 0
  %v64 = vsel %vm44, %v42, 0
  %v67 = vsel %vm44, %v43, 0
  %69 = vmatpush.msra.mxu0 0.0
  %70 = vmatpush.msra.mxu0 0.0
  %71 = vmatpush.msra.mxu0 0.0
  %72 = vmatpush.msra.mxu0 0.0
  %73 = vmatpush.msra.mxu0 0.0
  %74 = vmatpush.msra.mxu0 0.0
  %75 = vmatpush.msra.mxu0 0.0
  %76 = vmatpush.msra.mxu0 0.0
  %77 = vmatpush.msra.mxu0 0.0
  %78 = vmatpush.msra.mxu0 0.0
  %79 = vmatpush.msra.mxu0 0.0
  %80 = vmatpush.msra.mxu0 0.0
  %81 = vmatpush.msra.mxu0 0.0
  %82 = vmatpush.msra.mxu0 0.0
  %83 = vmatpush.msra.mxu0 0.0
  %84 = vmatpush.msra.mxu0 %v27
  %85 = vmatmul.f32.gmra.mxu0 %v46
  %v86 = vpop.f32.mrf.mxu0
  %v87 = vadd.f32 0.0, %v86
  %88 = vmatmul.f32.gmra.mxu0 %v49
  %v89 = vpop.f32.mrf.mxu0
  %v90 = vadd.f32 0.0, %v89
  %91 = vmatmul.f32.gmra.mxu0 %v52
  %v92 = vpop.f32.mrf.mxu0
  %v93 = vadd.f32 0.0, %v92
  %94 = vmatmul.f32.gmra.mxu0 %v55
  %v95 = vpop.f32.mrf.mxu0
  %v96 = vadd.f32 0.0, %v95
  %97 = vmatmul.f32.gmra.mxu0 %v58
  %v98 = vpop.f32.mrf.mxu0
  %v99 = vadd.f32 0.0, %v98
  %100 = vmatmul.f32.gmra.mxu0 %v61
  %v101 = vpop.f32.mrf.mxu0
  %v102 = vadd.f32 0.0, %v101
  %103 = vmatmul.f32.gmra.mxu0 %v64
  %v104 = vpop.f32.mrf.mxu0
  %v105 = vadd.f32 0.0, %v104
  %106 = vmatmul.f32.gmra.mxu0 %v67
  %v107 = vpop.f32.mrf.mxu0
  %v108 = vadd.f32 0.0, %v107
  %109 = vdwg.mxu0
  %v111 = vsel %vm44, %v28, 0
  %v114 = vsel %vm44, %v29, 0
  %v117 = vsel %vm44, %v30, 0
  %v120 = vsel %vm44, %v31, 0
  %v123 = vsel %vm44, %v32, 0
  %v126 = vsel %vm44, %v33, 0
  %v129 = vsel %vm44, %v34, 0
  %v132 = vsel %vm44, %v35, 0
  %134 = vmatpush.msra.mxu0 0.0
  %135 = vmatpush.msra.mxu0 0.0
  %136 = vmatpush.msra.mxu0 0.0
  %137 = vmatpush.msra.mxu0 0.0
  %138 = vmatpush.msra.mxu0 0.0
  %139 = vmatpush.msra.mxu0 0.0
  %140 = vmatpush.msra.mxu0 0.0
  %141 = vmatpush.msra.mxu0 0.0
  %142 = vmatpush.msra.mxu0 0.0
  %143 = vmatpush.msra.mxu0 0.0
  %144 = vmatpush.msra.mxu0 0.0
  %145 = vmatpush.msra.mxu0 0.0
  %146 = vmatpush.msra.mxu0 0.0
  %147 = vmatpush.msra.mxu0 0.0
  %148 = vmatpush.msra.mxu0 0.0
  %149 = vmatpush.msra.mxu0 %v26
  %150 = vmatmul.f32.gmra.mxu0 %v111
  %v151 = vpop.f32.mrf.mxu0
  %v152 = vadd.f32 %v87, %v151
  %153 = vmatmul.f32.gmra.mxu0 %v114
  %v154 = vpop.f32.mrf.mxu0
  %v155 = vadd.f32 %v90, %v154
  %156 = vmatmul.f32.gmra.mxu0 %v117
  %v157 = vpop.f32.mrf.mxu0
  %v158 = vadd.f32 %v93, %v157
  %159 = vmatmul.f32.gmra.mxu0 %v120
  %v160 = vpop.f32.mrf.mxu0
  %v161 = vadd.f32 %v96, %v160
  %162 = vmatmul.f32.gmra.mxu0 %v123
  %v163 = vpop.f32.mrf.mxu0
  %v164 = vadd.f32 %v99, %v163
  %165 = vmatmul.f32.gmra.mxu0 %v126
  %v166 = vpop.f32.mrf.mxu0
  %v167 = vadd.f32 %v102, %v166
  %168 = vmatmul.f32.gmra.mxu0 %v129
  %v169 = vpop.f32.mrf.mxu0
  %v170 = vadd.f32 %v105, %v169
  %171 = vmatmul.f32.gmra.mxu0 %v132
  %v172 = vpop.f32.mrf.mxu0
  %v173 = vadd.f32 %v108, %v172
  %174 = vdwg.mxu0
  %v175 = vld [vmem:[%s1] sm:$0xff]
  %v176 = vld [vmem:[%s1 + $0x8] sm:$0xff]
  %v177 = vld [vmem:[%s1 + $0x10] sm:$0xff]
  %v178 = vld [vmem:[%s1 + $0x18] sm:$0xff]
  %v179 = vld [vmem:[%s1 + $0x20] sm:$0xff]
  %v180 = vld [vmem:[%s1 + $0x28] sm:$0xff]
  %v181 = vld [vmem:[%s1 + $0x30] sm:$0xff]
  %v182 = vld [vmem:[%s1 + $0x38] sm:$0xff]
  %v183 = vld [vmem:[%s3] sm:$0xff]
  %v184 = vld [vmem:[%s3 + $0x8] sm:$0xff]
  %v185 = vld [vmem:[%s3 + $0x10] sm:$0xff]
  %v186 = vld [vmem:[%s3 + $0x18] sm:$0xff]
  %v187 = vld [vmem:[%s3 + $0x20] sm:$0xff]
  %v188 = vld [vmem:[%s3 + $0x28] sm:$0xff]
  %v189 = vld [vmem:[%s3 + $0x30] sm:$0xff]
  %v190 = vld [vmem:[%s3 + $0x38] sm:$0xff]
  %v192 = vsel %vm44, %v183, 0
  %v195 = vsel %vm44, %v184, 0
  %v198 = vsel %vm44, %v185, 0
  %v201 = vsel %vm44, %v186, 0
  %v204 = vsel %vm44, %v187, 0
  %v207 = vsel %vm44, %v188, 0
  %v210 = vsel %vm44, %v189, 0
  %v213 = vsel %vm44, %v190, 0
  %215 = vmatpush.msra.mxu0 0.0
  %216 = vmatpush.msra.mxu0 0.0
  %217 = vmatpush.msra.mxu0 0.0
  %218 = vmatpush.msra.mxu0 0.0
  %219 = vmatpush.msra.mxu0 0.0
  %220 = vmatpush.msra.mxu0 0.0
  %221 = vmatpush.msra.mxu0 0.0
  %222 = vmatpush.msra.mxu0 0.0
  %223 = vmatpush.msra.mxu0 0.0
  %224 = vmatpush.msra.mxu0 0.0
  %225 = vmatpush.msra.mxu0 0.0
  %226 = vmatpush.msra.mxu0 0.0
  %227 = vmatpush.msra.mxu0 0.0
  %228 = vmatpush.msra.mxu0 0.0
  %229 = vmatpush.msra.mxu0 0.0
  %230 = vmatpush.msra.mxu0 %v27
  %231 = vmatmul.f32.gmra.mxu0 %v192
  %v232 = vpop.f32.mrf.mxu0
  %v233 = vadd.f32 0.0, %v232
  %234 = vmatmul.f32.gmra.mxu0 %v195
  %v235 = vpop.f32.mrf.mxu0
  %v236 = vadd.f32 0.0, %v235
  %237 = vmatmul.f32.gmra.mxu0 %v198
  %v238 = vpop.f32.mrf.mxu0
  %v239 = vadd.f32 0.0, %v238
  %240 = vmatmul.f32.gmra.mxu0 %v201
  %v241 = vpop.f32.mrf.mxu0
  %v242 = vadd.f32 0.0, %v241
  %243 = vmatmul.f32.gmra.mxu0 %v204
  %v244 = vpop.f32.mrf.mxu0
  %v245 = vadd.f32 0.0, %v244
  %246 = vmatmul.f32.gmra.mxu0 %v207
  %v247 = vpop.f32.mrf.mxu0
  %v248 = vadd.f32 0.0, %v247
  %249 = vmatmul.f32.gmra.mxu0 %v210
  %v250 = vpop.f32.mrf.mxu0
  %v251 = vadd.f32 0.0, %v250
  %252 = vmatmul.f32.gmra.mxu0 %v213
  %v253 = vpop.f32.mrf.mxu0
  %v254 = vadd.f32 0.0, %v253
  %255 = vdwg.mxu0
  %v257 = vsel %vm44, %v175, 0
  %v260 = vsel %vm44, %v176, 0
  %v263 = vsel %vm44, %v177, 0
  %v266 = vsel %vm44, %v178, 0
  %v269 = vsel %vm44, %v179, 0
  %v272 = vsel %vm44, %v180, 0
  %v275 = vsel %vm44, %v181, 0
  %v278 = vsel %vm44, %v182, 0
  %280 = vmatpush.msra.mxu0 0.0
  %281 = vmatpush.msra.mxu0 0.0
  %282 = vmatpush.msra.mxu0 0.0
  %283 = vmatpush.msra.mxu0 0.0
  %284 = vmatpush.msra.mxu0 0.0
  %285 = vmatpush.msra.mxu0 0.0
  %286 = vmatpush.msra.mxu0 0.0
  %287 = vmatpush.msra.mxu0 0.0
  %288 = vmatpush.msra.mxu0 0.0
  %289 = vmatpush.msra.mxu0 0.0
  %290 = vmatpush.msra.mxu0 0.0
  %291 = vmatpush.msra.mxu0 0.0
  %292 = vmatpush.msra.mxu0 0.0
  %293 = vmatpush.msra.mxu0 0.0
  %294 = vmatpush.msra.mxu0 0.0
  %295 = vmatpush.msra.mxu0 %v26
  %296 = vmatmul.f32.gmra.mxu0 %v257
  %v297 = vpop.f32.mrf.mxu0
  %v298 = vadd.f32 %v233, %v297
  %299 = vmatmul.f32.gmra.mxu0 %v260
  %v300 = vpop.f32.mrf.mxu0
  %v301 = vadd.f32 %v236, %v300
  %302 = vmatmul.f32.gmra.mxu0 %v263
  %v303 = vpop.f32.mrf.mxu0
  %v304 = vadd.f32 %v239, %v303
  %305 = vmatmul.f32.gmra.mxu0 %v266
  %v306 = vpop.f32.mrf.mxu0
  %v307 = vadd.f32 %v242, %v306
  %308 = vmatmul.f32.gmra.mxu0 %v269
  %v309 = vpop.f32.mrf.mxu0
  %v310 = vadd.f32 %v245, %v309
  %311 = vmatmul.f32.gmra.mxu0 %v272
  %v312 = vpop.f32.mrf.mxu0
  %v313 = vadd.f32 %v248, %v312
  %314 = vmatmul.f32.gmra.mxu0 %v275
  %v315 = vpop.f32.mrf.mxu0
  %v316 = vadd.f32 %v251, %v315
  %317 = vmatmul.f32.gmra.mxu0 %v278
  %v318 = vpop.f32.mrf.mxu0
  %v319 = vadd.f32 %v254, %v318
  %320 = vdwg.mxu0
  %321 = vst [vmem:[#allocation2] sm:$0xff] %v152
  %322 = vst [vmem:[#allocation2 + $0x40] sm:$0xff] %v298
  %323 = vst [vmem:[#allocation2 + $0x8] sm:$0xff] %v155
  %324 = vst [vmem:[#allocation2 + $0x48] sm:$0xff] %v301
  %325 = vst [vmem:[#allocation2 + $0x10] sm:$0xff] %v158
  %326 = vst [vmem:[#allocation2 + $0x50] sm:$0xff] %v304
  %327 = vst [vmem:[#allocation2 + $0x18] sm:$0xff] %v161
  %328 = vst [vmem:[#allocation2 + $0x58] sm:$0xff] %v307
  %329 = vst [vmem:[#allocation2 + $0x20] sm:$0xff] %v164
  %330 = vst [vmem:[#allocation2 + $0x60] sm:$0xff] %v310
  %331 = vst [vmem:[#allocation2 + $0x28] sm:$0xff] %v167
  %332 = vst [vmem:[#allocation2 + $0x68] sm:$0xff] %v313
  %333 = vst [vmem:[#allocation2 + $0x30] sm:$0xff] %v170
  %334 = vst [vmem:[#allocation2 + $0x70] sm:$0xff] %v316
  %335 = vst [vmem:[#allocation2 + $0x38] sm:$0xff] %v173
  %336 = vst [vmem:[#allocation2 + $0x78] sm:$0xff] %v319
  %v337 = vld [vmem:[%s6] sm:$0xff]
  %v338 = vld [vmem:[%s6 + $0x8] sm:$0xff]
  %v339 = vld [vmem:[#allocation2] sm:$0xff]
  %v340 = vld [vmem:[#allocation2 + $0x8] sm:$0xff]
  %v341 = vld [vmem:[#allocation2 + $0x10] sm:$0xff]
  %v342 = vld [vmem:[#allocation2 + $0x18] sm:$0xff]
  %v343 = vld [vmem:[#allocation2 + $0x20] sm:$0xff]
  %v344 = vld [vmem:[#allocation2 + $0x28] sm:$0xff]
  %v345 = vld [vmem:[#allocation2 + $0x30] sm:$0xff]
  %v346 = vld [vmem:[#allocation2 + $0x38] sm:$0xff]
  %v347 = vld [vmem:[#allocation2 + $0x40] sm:$0xff]
  %v348 = vld [vmem:[#allocation2 + $0x48] sm:$0xff]
  %v349 = vld [vmem:[#allocation2 + $0x50] sm:$0xff]
  %v350 = vld [vmem:[#allocation2 + $0x58] sm:$0xff]
  %v351 = vld [vmem:[#allocation2 + $0x60] sm:$0xff]
  %v352 = vld [vmem:[#allocation2 + $0x68] sm:$0xff]
  %v353 = vld [vmem:[#allocation2 + $0x70] sm:$0xff]
  %v354 = vld [vmem:[#allocation2 + $0x78] sm:$0xff]
  %vm355 = vcmask 130048
  %v357 = vsel %vm355, %v337, 0
  %v360 = vsel %vm355, %v338, 0
  %362 = vmatpush.msra.mxu0 0.0
  %363 = vmatpush.msra.mxu0 0.0
  %364 = vmatpush.msra.mxu0 0.0
  %365 = vmatpush.msra.mxu0 0.0
  %366 = vmatpush.msra.mxu0 0.0
  %367 = vmatpush.msra.mxu0 0.0
  %368 = vmatpush.msra.mxu0 0.0
  %369 = vmatpush.msra.mxu0 0.0
  %370 = vmatpush.msra.mxu0 0.0
  %371 = vmatpush.msra.mxu0 0.0
  %372 = vmatpush.msra.mxu0 0.0
  %373 = vmatpush.msra.mxu0 0.0
  %374 = vmatpush.msra.mxu0 0.0
  %375 = vmatpush.msra.mxu0 0.0
  %376 = vmatpush.msra.mxu0 %v347
  %377 = vmatpush.msra.mxu0 %v339
  %378 = vmatmul.f32.gmra.mxu0 %v357
  %v379 = vpop.f32.mrf.mxu0
  %v380 = vadd.f32 0.0, %v379
  %381 = vmatmul.f32.gmra.mxu0 %v360
  %v382 = vpop.f32.mrf.mxu0
  %v383 = vadd.f32 0.0, %v382
  %384 = vdwg.mxu0
  %385 = vmatpush.msra.mxu0 0.0
  %386 = vmatpush.msra.mxu0 0.0
  %387 = vmatpush.msra.mxu0 0.0
  %388 = vmatpush.msra.mxu0 0.0
  %389 = vmatpush.msra.mxu0 0.0
  %390 = vmatpush.msra.mxu0 0.0
  %391 = vmatpush.msra.mxu0 0.0
  %392 = vmatpush.msra.mxu0 0.0
  %393 = vmatpush.msra.mxu0 0.0
  %394 = vmatpush.msra.mxu0 0.0
  %395 = vmatpush.msra.mxu0 0.0
  %396 = vmatpush.msra.mxu0 0.0
  %397 = vmatpush.msra.mxu0 0.0
  %398 = vmatpush.msra.mxu0 0.0
  %399 = vmatpush.msra.mxu0 %v348
  %400 = vmatpush.msra.mxu0 %v340
  %401 = vmatmul.f32.gmra.mxu0 %v357
  %v402 = vpop.f32.mrf.mxu0
  %v403 = vadd.f32 0.0, %v402
  %404 = vmatmul.f32.gmra.mxu0 %v360
  %v405 = vpop.f32.mrf.mxu0
  %v406 = vadd.f32 0.0, %v405
  %407 = vdwg.mxu0
  %408 = vmatpush.msra.mxu0 0.0
  %409 = vmatpush.msra.mxu0 0.0
  %410 = vmatpush.msra.mxu0 0.0
  %411 = vmatpush.msra.mxu0 0.0
  %412 = vmatpush.msra.mxu0 0.0
  %413 = vmatpush.msra.mxu0 0.0
  %414 = vmatpush.msra.mxu0 0.0
  %415 = vmatpush.msra.mxu0 0.0
  %416 = vmatpush.msra.mxu0 0.0
  %417 = vmatpush.msra.mxu0 0.0
  %418 = vmatpush.msra.mxu0 0.0
  %419 = vmatpush.msra.mxu0 0.0
  %420 = vmatpush.msra.mxu0 0.0
  %421 = vmatpush.msra.mxu0 0.0
  %422 = vmatpush.msra.mxu0 %v349
  %423 = vmatpush.msra.mxu0 %v341
  %424 = vmatmul.f32.gmra.mxu0 %v357
  %v425 = vpop.f32.mrf.mxu0
  %v426 = vadd.f32 0.0, %v425
  %427 = vmatmul.f32.gmra.mxu0 %v360
  %v428 = vpop.f32.mrf.mxu0
  %v429 = vadd.f32 0.0, %v428
  %430 = vdwg.mxu0
  %431 = vmatpush.msra.mxu0 0.0
  %432 = vmatpush.msra.mxu0 0.0
  %433 = vmatpush.msra.mxu0 0.0
  %434 = vmatpush.msra.mxu0 0.0
  %435 = vmatpush.msra.mxu0 0.0
  %436 = vmatpush.msra.mxu0 0.0
  %437 = vmatpush.msra.mxu0 0.0
  %438 = vmatpush.msra.mxu0 0.0
  %439 = vmatpush.msra.mxu0 0.0
  %440 = vmatpush.msra.mxu0 0.0
  %441 = vmatpush.msra.mxu0 0.0
  %442 = vmatpush.msra.mxu0 0.0
  %443 = vmatpush.msra.mxu0 0.0
  %444 = vmatpush.msra.mxu0 0.0
  %445 = vmatpush.msra.mxu0 %v350
  %446 = vmatpush.msra.mxu0 %v342
  %447 = vmatmul.f32.gmra.mxu0 %v357
  %v448 = vpop.f32.mrf.mxu0
  %v449 = vadd.f32 0.0, %v448
  %450 = vmatmul.f32.gmra.mxu0 %v360
  %v451 = vpop.f32.mrf.mxu0
  %v452 = vadd.f32 0.0, %v451
  %453 = vdwg.mxu0
  %454 = vmatpush.msra.mxu0 0.0
  %455 = vmatpush.msra.mxu0 0.0
  %456 = vmatpush.msra.mxu0 0.0
  %457 = vmatpush.msra.mxu0 0.0
  %458 = vmatpush.msra.mxu0 0.0
  %459 = vmatpush.msra.mxu0 0.0
  %460 = vmatpush.msra.mxu0 0.0
  %461 = vmatpush.msra.mxu0 0.0
  %462 = vmatpush.msra.mxu0 0.0
  %463 = vmatpush.msra.mxu0 0.0
  %464 = vmatpush.msra.mxu0 0.0
  %465 = vmatpush.msra.mxu0 0.0
  %466 = vmatpush.msra.mxu0 0.0
  %467 = vmatpush.msra.mxu0 0.0
  %468 = vmatpush.msra.mxu0 %v351
  %469 = vmatpush.msra.mxu0 %v343
  %470 = vmatmul.f32.gmra.mxu0 %v357
  %v471 = vpop.f32.mrf.mxu0
  %v472 = vadd.f32 0.0, %v471
  %473 = vmatmul.f32.gmra.mxu0 %v360
  %v474 = vpop.f32.mrf.mxu0
  %v475 = vadd.f32 0.0, %v474
  %476 = vdwg.mxu0
  %477 = vmatpush.msra.mxu0 0.0
  %478 = vmatpush.msra.mxu0 0.0
  %479 = vmatpush.msra.mxu0 0.0
  %480 = vmatpush.msra.mxu0 0.0
  %481 = vmatpush.msra.mxu0 0.0
  %482 = vmatpush.msra.mxu0 0.0
  %483 = vmatpush.msra.mxu0 0.0
  %484 = vmatpush.msra.mxu0 0.0
  %485 = vmatpush.msra.mxu0 0.0
  %486 = vmatpush.msra.mxu0 0.0
  %487 = vmatpush.msra.mxu0 0.0
  %488 = vmatpush.msra.mxu0 0.0
  %489 = vmatpush.msra.mxu0 0.0
  %490 = vmatpush.msra.mxu0 0.0
  %491 = vmatpush.msra.mxu0 %v352
  %492 = vmatpush.msra.mxu0 %v344
  %493 = vmatmul.f32.gmra.mxu0 %v357
  %v494 = vpop.f32.mrf.mxu0
  %v495 = vadd.f32 0.0, %v494
  %496 = vmatmul.f32.gmra.mxu0 %v360
  %v497 = vpop.f32.mrf.mxu0
  %v498 = vadd.f32 0.0, %v497
  %499 = vdwg.mxu0
  %500 = vmatpush.msra.mxu0 0.0
  %501 = vmatpush.msra.mxu0 0.0
  %502 = vmatpush.msra.mxu0 0.0
  %503 = vmatpush.msra.mxu0 0.0
  %504 = vmatpush.msra.mxu0 0.0
  %505 = vmatpush.msra.mxu0 0.0
  %506 = vmatpush.msra.mxu0 0.0
  %507 = vmatpush.msra.mxu0 0.0
  %508 = vmatpush.msra.mxu0 0.0
  %509 = vmatpush.msra.mxu0 0.0
  %510 = vmatpush.msra.mxu0 0.0
  %511 = vmatpush.msra.mxu0 0.0
  %512 = vmatpush.msra.mxu0 0.0
  %513 = vmatpush.msra.mxu0 0.0
  %514 = vmatpush.msra.mxu0 %v353
  %515 = vmatpush.msra.mxu0 %v345
  %516 = vmatmul.f32.gmra.mxu0 %v357
  %v517 = vpop.f32.mrf.mxu0
  %v518 = vadd.f32 0.0, %v517
  %519 = vmatmul.f32.gmra.mxu0 %v360
  %v520 = vpop.f32.mrf.mxu0
  %v521 = vadd.f32 0.0, %v520
  %522 = vdwg.mxu0
  %523 = vmatpush.msra.mxu0 0.0
  %524 = vmatpush.msra.mxu0 0.0
  %525 = vmatpush.msra.mxu0 0.0
  %526 = vmatpush.msra.mxu0 0.0
  %527 = vmatpush.msra.mxu0 0.0
  %528 = vmatpush.msra.mxu0 0.0
  %529 = vmatpush.msra.mxu0 0.0
  %530 = vmatpush.msra.mxu0 0.0
  %531 = vmatpush.msra.mxu0 0.0
  %532 = vmatpush.msra.mxu0 0.0
  %533 = vmatpush.msra.mxu0 0.0
  %534 = vmatpush.msra.mxu0 0.0
  %535 = vmatpush.msra.mxu0 0.0
  %536 = vmatpush.msra.mxu0 0.0
  %537 = vmatpush.msra.mxu0 %v354
  %538 = vmatpush.msra.mxu0 %v346
  %539 = vmatmul.f32.gmra.mxu0 %v357
  %v540 = vpop.f32.mrf.mxu0
  %v541 = vadd.f32 0.0, %v540
  %542 = vmatmul.f32.gmra.mxu0 %v360
  %v543 = vpop.f32.mrf.mxu0
  %v544 = vadd.f32 0.0, %v543
  %545 = vdwg.mxu0
  %546 = vst [vmem:[%s7] sm:$0xff] %v380
  %547 = vst [vmem:[%s7 + $0x8] sm:$0xff] %v383
  %s548 = scalar_lea.vmem %s7, 16
  %549 = vst [vmem:[%s548] sm:$0xff] %v403
  %550 = vst [vmem:[%s548 + $0x8] sm:$0xff] %v406
  %s551 = scalar_lea.vmem %s7, 32
  %552 = vst [vmem:[%s551] sm:$0xff] %v426
  %553 = vst [vmem:[%s551 + $0x8] sm:$0xff] %v429
  %s554 = scalar_lea.vmem %s7, 48
  %555 = vst [vmem:[%s554] sm:$0xff] %v449
  %556 = vst [vmem:[%s554 + $0x8] sm:$0xff] %v452
  %s557 = scalar_lea.vmem %s7, 64
  %558 = vst [vmem:[%s557] sm:$0xff] %v472
  %559 = vst [vmem:[%s557 + $0x8] sm:$0xff] %v475
  %s560 = scalar_lea.vmem %s7, 80
  %561 = vst [vmem:[%s560] sm:$0xff] %v495
  %562 = vst [vmem:[%s560 + $0x8] sm:$0xff] %v498
  %s563 = scalar_lea.vmem %s7, 96
  %564 = vst [vmem:[%s563] sm:$0xff] %v518
  %565 = vst [vmem:[%s563 + $0x8] sm:$0xff] %v521
  %s566 = scalar_lea.vmem %s7, 112
  %567 = vst [vmem:[%s566] sm:$0xff] %v541
  %568 = vst [vmem:[%s566 + $0x8] sm:$0xff] %v544
  // Predicated region
  $region30: #{_forward_impl.2} parent=0 // pred_check
    _
  $region31: #{_forward_impl.2} parent=0 // pred_check_branch
    %570 = sbr.rel (0) target = $region33
  $region32: #{_forward_impl.2} parent=0 // pred_region
    _
  $region33: #{_forward_impl.2} parent=0 // pred_fallthru
    _
  // Predicated region
  $region34: #{_forward_impl.2} parent=0 // pred_check
    _
  $region35: #{_forward_impl.2} parent=0 // pred_check_branch
    %572 = sbr.rel (0) target = $region37
  $region36: #{_forward_impl.2} parent=0 // pred_region
    _
  $region37: #{_forward_impl.2} parent=0 // pred_fallthru
    _

</llo_original>
